<compile_context>
chip_gen: v7x
topology: tpu7x:2x2x1
jax: 0.10.0
libtpu: 0.0.40
codegen_flags: <defaults>
</compile_context>

<pallas_src>
import jax
import jax.numpy as jnp
from jax.experimental import pallas as pl
from jax.experimental.pallas import tpu as pltpu

LANE = 128
SUBLANE = 8


def _round_up(x, m):
    return (x + m - 1) // m * m


def _graph_conv(a_bf, h_f32, w_ref, b_ref, apply_relu):
    """One GraphConv layer on VMEM-resident values.

    a_bf:   [N, N]        bf16 normalized adjacency (value)
    h_f32:  [N, Fin]      f32 node features (value)
    w_ref:  [Fin, Fout]   bf16 weight ref
    b_ref:  [1, Fout]     f32 bias ref
    """
    w = w_ref[...]
    h_bf = h_f32.astype(jnp.bfloat16)
    fin, fout = w.shape
    if fin <= fout:
        # (A @ H) @ W : smaller N^2 term when expanding features.
        ah = jnp.dot(a_bf, h_bf, preferred_element_type=jnp.float32)
        out = jnp.dot(ah.astype(jnp.bfloat16), w, preferred_element_type=jnp.float32)
    else:
        # A @ (H @ W) : smaller N^2 term when contracting features.
        hw = jnp.dot(h_bf, w, preferred_element_type=jnp.float32)
        out = jnp.dot(a_bf, hw.astype(jnp.bfloat16), preferred_element_type=jnp.float32)
    out = out + b_ref[...]           # bias add in f32 (VPU)
    if apply_relu:
        out = jnp.maximum(out, 0.0)
    return out


def gcn_fused_kernel(a_ref, x_ref,
                     w1_ref, b1_ref, w2_ref, b2_ref,
                     w3_ref, b3_ref, w4_ref, b4_ref,
                     o_ref):
    """Whole 4-layer GCN forward in one kernel invocation (everything in VMEM)."""
    a_bf = a_ref[...].astype(jnp.bfloat16)
    h = x_ref[...]                                    # f32
    h = _graph_conv(a_bf, h, w1_ref, b1_ref, True)
    h = _graph_conv(a_bf, h, w2_ref, b2_ref, True)
    # dropout (eval mode) -> identity
    h = _graph_conv(a_bf, h, w3_ref, b3_ref, True)
    # dropout (eval mode) -> identity
    h = _graph_conv(a_bf, h, w4_ref, b4_ref, False)
    o_ref[...] = h.astype(o_ref.dtype)                # lane-dense (padded) store


def gcn_forward(a_norm, x, params, *, n_classes):
    """Pads inputs/weights for TPU tile alignment, runs the fused kernel, un-pads."""
    n = a_norm.shape[0]
    in_feats = x.shape[1]
    hidden = params[0][0].shape[1]

    n_pad = _round_up(n, SUBLANE)
    fin_pad = _round_up(in_feats, LANE)
    c_pad = _round_up(n_classes, LANE)

    a_p = jnp.zeros((n_pad, n_pad), jnp.float32).at[:n, :n].set(a_norm)
    x_p = jnp.zeros((n_pad, fin_pad), jnp.float32).at[:n, :in_feats].set(x)

    dims_in = [fin_pad, hidden, hidden, hidden]
    dims_out = [hidden, hidden, hidden, c_pad]
    inputs = [a_p, x_p]
    for (w, b), fi, fo in zip(params, dims_in, dims_out):
        w_p = jnp.zeros((fi, fo), jnp.float32).at[: w.shape[0], : w.shape[1]].set(w)
        b_p = jnp.zeros((1, fo), jnp.float32).at[0, : b.shape[0]].set(b)
        inputs.append(w_p.astype(jnp.bfloat16))   # bf16 weights: MXU-native, half the DMA
        inputs.append(b_p)                        # bias stays f32

    out_p = pl.pallas_call(
        gcn_fused_kernel,
        out_shape=jax.ShapeDtypeStruct((n_pad, c_pad), jnp.float32),
        in_specs=[pl.BlockSpec(memory_space=pltpu.MemorySpace.VMEM)] * len(inputs),
        out_specs=pl.BlockSpec(memory_space=pltpu.MemorySpace.VMEM),
    )(*inputs)
    return out_p[:n, :n_classes]


def init_params(key, in_feats, n_classes, hidden=512):
    """Deterministic Glorot-uniform init, matching GraphConv parameter shapes."""
    dims = [(in_feats, hidden), (hidden, hidden), (hidden, hidden), (hidden, n_classes)]
    params = []
    for fin, fout in dims:
        kw, key = jax.random.split(key)
        limit = jnp.sqrt(6.0 / (fin + fout))
        w = jax.random.uniform(kw, (fin, fout), jnp.float32, -limit, limit)
        b = jnp.zeros((fout,), jnp.float32)
        params.append((w, b))
    return params


def normalize_adjacency(adj):
    """Symmetric normalization D^-1/2 A D^-1/2 (DGL GraphConv norm='both')."""
    deg = jnp.sum(adj, axis=1)
    d_inv_sqrt = jnp.where(deg > 0, 1.0 / jnp.sqrt(deg), 0.0)
    return adj * d_inv_sqrt[:, None] * d_inv_sqrt[None, :]


def gcn_reference(a_norm, x, params):
    """Pure-JAX reference mirroring the kernel's bf16-operand / f32-accumulate math."""
    a_bf = a_norm.astype(jnp.bfloat16)
    h = x
    for i, (w, b) in enumerate(params):
        w_bf = w.astype(jnp.bfloat16)
        h_bf = h.astype(jnp.bfloat16)
        fin, fout = w.shape
        if fin <= fout:
            ah = jnp.dot(a_bf, h_bf, preferred_element_type=jnp.float32)
            out = jnp.dot(ah.astype(jnp.bfloat16), w_bf, preferred_element_type=jnp.float32)
        else:
            hw = jnp.dot(h_bf, w_bf, preferred_element_type=jnp.float32)
            out = jnp.dot(a_bf, hw.astype(jnp.bfloat16), preferred_element_type=jnp.float32)
        out = out + b[None, :]
        if i < len(params) - 1:
            out = jnp.maximum(out, 0.0)
        h = out
    return h


if __name__ == "__main__":
    N = 16          # number of graph nodes
    IN_FEATS = 32   # input feature dim
    N_CLASSES = 8   # output classes
    HIDDEN = 512    # fixed by the module

    key = jax.random.PRNGKey(0)
    k_adj, k_x, k_params = jax.random.split(key, 3)

    # Random undirected graph with self-loops (avoid zero degree).
    rand = jax.random.uniform(k_adj, (N, N))
    adj = (rand + rand.T > 1.2).astype(jnp.float32)
    adj = jnp.maximum(adj, jnp.eye(N, dtype=jnp.float32))
    a_norm = normalize_adjacency(adj)

    x = jax.random.normal(k_x, (N, IN_FEATS), jnp.float32)
    params = init_params(k_params, IN_FEATS, N_CLASSES, HIDDEN)

    out = gcn_forward(a_norm, x, params, n_classes=N_CLASSES)
    out = jax.block_until_ready(out)

    ref = gcn_reference(a_norm, x, params)
    assert out.shape == (N, N_CLASSES)
    assert jnp.allclose(out, ref, atol=1e-2, rtol=1e-2), float(jnp.max(jnp.abs(out - ref)))

    print("KERNEL_OK")
</pallas_src>

<mosaic_0001>
module attributes {stable_mosaic.version = 11 : i64} {
  func.func @gcn_fused_kernel(%arg0: memref<16x16xf32, #tpu.memory_space<vmem>>, %arg1: memref<16x128xf32, #tpu.memory_space<vmem>>, %arg2: memref<128x512xbf16, #tpu.memory_space<vmem>>, %arg3: memref<1x512xf32, #tpu.memory_space<vmem>>, %arg4: memref<512x512xbf16, #tpu.memory_space<vmem>>, %arg5: memref<1x512xf32, #tpu.memory_space<vmem>>, %arg6: memref<512x512xbf16, #tpu.memory_space<vmem>>, %arg7: memref<1x512xf32, #tpu.memory_space<vmem>>, %arg8: memref<512x128xbf16, #tpu.memory_space<vmem>>, %arg9: memref<1x128xf32, #tpu.memory_space<vmem>>, %arg10: memref<16x128xf32, #tpu.memory_space<vmem>>) attributes {dimension_semantics = [], scalar_prefetch = 0 : i64, scratch_operands = 0 : i64, tpu.core_type = #tpu.core_type<tc>} {
    %c0 = arith.constant 0 : index
    %c0_0 = arith.constant 0 : index
    %0 = vector.load %arg0[%c0, %c0_0] : memref<16x16xf32, #tpu.memory_space<vmem>>, vector<16x16xf32>
    %1 = arith.truncf %0 : vector<16x16xf32> to vector<16x16xbf16>
    %c0_1 = arith.constant 0 : index
    %c0_2 = arith.constant 0 : index
    %2 = vector.load %arg1[%c0_1, %c0_2] : memref<16x128xf32, #tpu.memory_space<vmem>>, vector<16x128xf32>
    %c0_3 = arith.constant 0 : index
    %c0_4 = arith.constant 0 : index
    %3 = vector.load %arg2[%c0_3, %c0_4] : memref<128x512xbf16, #tpu.memory_space<vmem>>, vector<128x512xbf16>
    %4 = arith.truncf %2 : vector<16x128xf32> to vector<16x128xbf16>
    %cst = arith.constant dense<0.000000e+00> : vector<16x128xf32>
    %5 = tpu.matmul %1, %4, %cst {dimension_numbers = #tpu.dot_dimension_numbers<[1], [0], [0], [1], [0, 0, 1, 1], [], []>} : vector<16x16xbf16>, vector<16x128xbf16>, vector<16x128xf32> -> vector<16x128xf32>
    %6 = arith.truncf %5 : vector<16x128xf32> to vector<16x128xbf16>
    %cst_5 = arith.constant dense<0.000000e+00> : vector<16x512xf32>
    %7 = tpu.matmul %6, %3, %cst_5 {dimension_numbers = #tpu.dot_dimension_numbers<[1], [0], [0], [1], [0, 0, 1, 1], [], []>} : vector<16x128xbf16>, vector<128x512xbf16>, vector<16x512xf32> -> vector<16x512xf32>
    %c0_6 = arith.constant 0 : index
    %c0_7 = arith.constant 0 : index
    %8 = vector.load %arg3[%c0_6, %c0_7] : memref<1x512xf32, #tpu.memory_space<vmem>>, vector<1x512xf32>
    %9 = vector.broadcast %8 : vector<1x512xf32> to vector<16x512xf32>
    %10 = arith.addf %7, %9 : vector<16x512xf32>
    %cst_8 = arith.constant 0.000000e+00 : f32
    %11 = vector.broadcast %cst_8 : f32 to vector<16x512xf32>
    %12 = arith.maximumf %10, %11 : vector<16x512xf32>
    %c0_9 = arith.constant 0 : index
    %c0_10 = arith.constant 0 : index
    %13 = vector.load %arg4[%c0_9, %c0_10] : memref<512x512xbf16, #tpu.memory_space<vmem>>, vector<512x512xbf16>
    %14 = arith.truncf %12 : vector<16x512xf32> to vector<16x512xbf16>
    %cst_11 = arith.constant dense<0.000000e+00> : vector<16x512xf32>
    %15 = tpu.matmul %1, %14, %cst_11 {dimension_numbers = #tpu.dot_dimension_numbers<[1], [0], [0], [1], [0, 0, 1, 1], [], []>} : vector<16x16xbf16>, vector<16x512xbf16>, vector<16x512xf32> -> vector<16x512xf32>
    %16 = arith.truncf %15 : vector<16x512xf32> to vector<16x512xbf16>
    %cst_12 = arith.constant dense<0.000000e+00> : vector<16x512xf32>
    %17 = tpu.matmul %16, %13, %cst_12 {dimension_numbers = #tpu.dot_dimension_numbers<[1], [0], [0], [1], [0, 0, 1, 1], [], []>} : vector<16x512xbf16>, vector<512x512xbf16>, vector<16x512xf32> -> vector<16x512xf32>
    %c0_13 = arith.constant 0 : index
    %c0_14 = arith.constant 0 : index
    %18 = vector.load %arg5[%c0_13, %c0_14] : memref<1x512xf32, #tpu.memory_space<vmem>>, vector<1x512xf32>
    %19 = vector.broadcast %18 : vector<1x512xf32> to vector<16x512xf32>
    %20 = arith.addf %17, %19 : vector<16x512xf32>
    %cst_15 = arith.constant 0.000000e+00 : f32
    %21 = vector.broadcast %cst_15 : f32 to vector<16x512xf32>
    %22 = arith.maximumf %20, %21 : vector<16x512xf32>
    %c0_16 = arith.constant 0 : index
    %c0_17 = arith.constant 0 : index
    %23 = vector.load %arg6[%c0_16, %c0_17] : memref<512x512xbf16, #tpu.memory_space<vmem>>, vector<512x512xbf16>
    %24 = arith.truncf %22 : vector<16x512xf32> to vector<16x512xbf16>
    %cst_18 = arith.constant dense<0.000000e+00> : vector<16x512xf32>
    %25 = tpu.matmul %1, %24, %cst_18 {dimension_numbers = #tpu.dot_dimension_numbers<[1], [0], [0], [1], [0, 0, 1, 1], [], []>} : vector<16x16xbf16>, vector<16x512xbf16>, vector<16x512xf32> -> vector<16x512xf32>
    %26 = arith.truncf %25 : vector<16x512xf32> to vector<16x512xbf16>
    %cst_19 = arith.constant dense<0.000000e+00> : vector<16x512xf32>
    %27 = tpu.matmul %26, %23, %cst_19 {dimension_numbers = #tpu.dot_dimension_numbers<[1], [0], [0], [1], [0, 0, 1, 1], [], []>} : vector<16x512xbf16>, vector<512x512xbf16>, vector<16x512xf32> -> vector<16x512xf32>
    %c0_20 = arith.constant 0 : index
    %c0_21 = arith.constant 0 : index
    %28 = vector.load %arg7[%c0_20, %c0_21] : memref<1x512xf32, #tpu.memory_space<vmem>>, vector<1x512xf32>
    %29 = vector.broadcast %28 : vector<1x512xf32> to vector<16x512xf32>
    %30 = arith.addf %27, %29 : vector<16x512xf32>
    %cst_22 = arith.constant 0.000000e+00 : f32
    %31 = vector.broadcast %cst_22 : f32 to vector<16x512xf32>
    %32 = arith.maximumf %30, %31 : vector<16x512xf32>
    %c0_23 = arith.constant 0 : index
    %c0_24 = arith.constant 0 : index
    %33 = vector.load %arg8[%c0_23, %c0_24] : memref<512x128xbf16, #tpu.memory_space<vmem>>, vector<512x128xbf16>
    %34 = arith.truncf %32 : vector<16x512xf32> to vector<16x512xbf16>
    %cst_25 = arith.constant dense<0.000000e+00> : vector<16x128xf32>
    %35 = tpu.matmul %34, %33, %cst_25 {dimension_numbers = #tpu.dot_dimension_numbers<[1], [0], [0], [1], [0, 0, 1, 1], [], []>} : vector<16x512xbf16>, vector<512x128xbf16>, vector<16x128xf32> -> vector<16x128xf32>
    %36 = arith.truncf %35 : vector<16x128xf32> to vector<16x128xbf16>
    %cst_26 = arith.constant dense<0.000000e+00> : vector<16x128xf32>
    %37 = tpu.matmul %1, %36, %cst_26 {dimension_numbers = #tpu.dot_dimension_numbers<[1], [0], [0], [1], [0, 0, 1, 1], [], []>} : vector<16x16xbf16>, vector<16x128xbf16>, vector<16x128xf32> -> vector<16x128xf32>
    %c0_27 = arith.constant 0 : index
    %c0_28 = arith.constant 0 : index
    %38 = vector.load %arg9[%c0_27, %c0_28] : memref<1x128xf32, #tpu.memory_space<vmem>>, vector<1x128xf32>
    %39 = vector.broadcast %38 : vector<1x128xf32> to vector<16x128xf32>
    %40 = arith.addf %37, %39 : vector<16x128xf32>
    %c0_29 = arith.constant 0 : index
    %c0_30 = arith.constant 0 : index
    %41 = vector.load %arg10[%c0_29, %c0_30] : memref<16x128xf32, #tpu.memory_space<vmem>>, vector<16x128xf32>
    tpu.vector_store %arg10[%c0_29, %c0_30], %40 {strides = array<i32>} : memref<16x128xf32, #tpu.memory_space<vmem>>, vector<16x128xf32>,
    return
  }
}

</mosaic_0001>

<llo_original>
// kernel: tpu_custom_call.1
$region0: #{tpu_custom_call.1}
  #allocation0 [shape = 'u32[]', space=smem, size = 0x4, offset = 0x4, fixed_abs, tag = 'smem constant byte address 0x4 - core index']
  #allocation1 [shape = 'u32[144,128]{1,0:T(1,128)}', space=vmem, size = 0x12000, scoped, tag = 'internal scratch']
  %s0 = inlined_call_operand.hbm [shape: f32[16,16], index: 0, kind: input, shape index: {}]
  %s1 = inlined_call_operand.hbm [shape: f32[16,128], index: 1, kind: input, shape index: {}]
  %s2 = inlined_call_operand.hbm [shape: bf16[128,512], index: 2, kind: input, shape index: {}]
  %s3 = inlined_call_operand.vmem [shape: f32[1,512], index: 3, kind: input, shape index: {}]
  %s4 = inlined_call_operand.hbm [shape: bf16[512,512], index: 4, kind: input, shape index: {}]
  %s5 = inlined_call_operand.vmem [shape: f32[1,512], index: 5, kind: input, shape index: {}]
  %s6 = inlined_call_operand.hbm [shape: bf16[512,512], index: 6, kind: input, shape index: {}]
  %s7 = inlined_call_operand.vmem [shape: f32[1,512], index: 7, kind: input, shape index: {}]
  %s8 = inlined_call_operand.hbm [shape: bf16[512,128], index: 8, kind: input, shape index: {}]
  %s9 = inlined_call_operand.vmem [shape: f32[1,128], index: 9, kind: input, shape index: {}]
  %s10 = inlined_call_operand.hbm [shape: f32[16,128], index: 10, kind: output, shape index: {}]
  %s11 = sld [smem:[#allocation0]]
  $region74: #{tpu_custom_call.1} parent=0
    _
  %s13 = ssub.s32 1, %s11
  %s14 = scalar_select 0, %s13, %s11
  $region1: #{tpu_custom_call.1} parent=0
    #allocation2 [shape = 'u8[8192]{0}', space=vmem, size = 0x2000, scoped, tag = 'input window, operand 0, single buffered']
    #allocation3 [shape = 's32[1]{0}', space=sflag, size = 0x4, scoped, tag = 'scoped memory for tpu_custom_call.1']
    #allocation4 [shape = 's32[1]{0}', space=sflag, size = 0x4, scoped, tag = 'scoped memory for tpu_custom_call.1']
    #allocation5 [shape = 'u8[8192]{0}', space=vmem, size = 0x2000, scoped, tag = 'input window, operand 1, single buffered']
    #allocation6 [shape = 's32[1]{0}', space=sflag, size = 0x4, scoped, tag = 'scoped memory for tpu_custom_call.1']
    #allocation7 [shape = 'u8[131072]{0}', space=vmem, size = 0x20000, scoped, tag = 'input window, operand 2, single buffered']
    #allocation8 [shape = 'u8[524288]{0}', space=vmem, size = 0x80000, scoped, tag = 'input window, operand 4, single buffered']
    #allocation9 [shape = 's32[1]{0}', space=sflag, size = 0x4, scoped, tag = 'scoped memory for tpu_custom_call.1']
    #allocation10 [shape = 'u8[524288]{0}', space=vmem, size = 0x80000, scoped, tag = 'input window, operand 6, single buffered']
    #allocation11 [shape = 'u8[131072]{0}', space=vmem, size = 0x20000, scoped, tag = 'input window, operand 8, single buffered']
    #allocation12 [shape = 's32[1]{0}', space=sflag, size = 0x4, scoped, tag = 'scoped memory for tpu_custom_call.1']
    #allocation13 [shape = 'u8[8192]{0}', space=vmem, size = 0x2000, scoped, tag = 'output window, operand 0, single buffered']
    %15 = vsyncpa [#allocation3], 0
    %16 = vsyncpa [#allocation6], 0
    %17 = vsyncpa [#allocation9], 0
    %18 = vsyncpa [#allocation12], 0
    %19 = vsyncpa [#allocation4], 0
    // Predicated region
    $region2: #{tpu_custom_call.1} parent=1 // pred_check
      _
    $region3: #{tpu_custom_call.1} parent=1 // pred_check_branch
      %21 = sbr.rel (0) target = $region5
    $region4: #{tpu_custom_call.1} parent=1 // pred_region
      %s23 = ssub.s32 256, 256
      %24 = vsyncadd [#allocation3], %s23
      %s25 = sshll.u32 [#allocation2], 4
      %s26 = int_to_ptr.vmem [resolvable:$true] %s25
      %31 = dma.hbm_to_vmem [thread:$0]  %s0, 256, %s26, [#allocation3], 128, 128, 8
    $region5: #{tpu_custom_call.1} parent=1 // pred_fallthru
      _
    // Predicated region
    $region6: #{tpu_custom_call.1} parent=1 // pred_check
      _
    $region7: #{tpu_custom_call.1} parent=1 // pred_check_branch
      %33 = sbr.rel (0) target = $region9
    $region8: #{tpu_custom_call.1} parent=1 // pred_region
      %s35 = ssub.s32 256, 256
      %36 = vsyncadd [#allocation6], %s35
      %s37 = sshll.u32 [#allocation5], 4
      %s38 = int_to_ptr.vmem [resolvable:$true] %s37
      %43 = dma.hbm_to_vmem [thread:$0]  %s1, 256, %s38, [#allocation6], 128, 128, 8
    $region9: #{tpu_custom_call.1} parent=1 // pred_fallthru
      _
    // Predicated region
    $region10: #{tpu_custom_call.1} parent=1 // pred_check
      _
    $region11: #{tpu_custom_call.1} parent=1 // pred_check_branch
      %45 = sbr.rel (0) target = $region13
    $region12: #{tpu_custom_call.1} parent=1 // pred_region
      %s47 = ssub.s32 4096, 4096
      %48 = vsyncadd [#allocation6], %s47
      %s49 = sshll.u32 [#allocation7], 4
      %s50 = int_to_ptr.vmem [resolvable:$true] %s49
      %55 = dma.hbm_to_vmem [thread:$0]  %s2, 4096, %s50, [#allocation6], 256, 256, 16
    $region13: #{tpu_custom_call.1} parent=1 // pred_fallthru
      _
    // Predicated region
    $region14: #{tpu_custom_call.1} parent=1 // pred_check
      _
    $region15: #{tpu_custom_call.1} parent=1 // pred_check_branch
      %57 = sbr.rel (0) target = $region17
    $region16: #{tpu_custom_call.1} parent=1 // pred_region
      _
    $region17: #{tpu_custom_call.1} parent=1 // pred_fallthru
      _
    // Predicated region
    $region18: #{tpu_custom_call.1} parent=1 // pred_check
      _
    $region19: #{tpu_custom_call.1} parent=1 // pred_check_branch
      %59 = sbr.rel (0) target = $region21
    $region20: #{tpu_custom_call.1} parent=1 // pred_region
      %s61 = ssub.s32 16384, 16384
      %62 = vsyncadd [#allocation9], %s61
      %s63 = sshll.u32 [#allocation8], 4
      %s64 = int_to_ptr.vmem [resolvable:$true] %s63
      %69 = dma.hbm_to_vmem [thread:$0]  %s4, 16384, %s64, [#allocation9], 256, 256, 16
    $region21: #{tpu_custom_call.1} parent=1 // pred_fallthru
      _
    // Predicated region
    $region22: #{tpu_custom_call.1} parent=1 // pred_check
      _
    $region23: #{tpu_custom_call.1} parent=1 // pred_check_branch
      %71 = sbr.rel (0) target = $region25
    $region24: #{tpu_custom_call.1} parent=1 // pred_region
      _
    $region25: #{tpu_custom_call.1} parent=1 // pred_fallthru
      _
    // Predicated region
    $region26: #{tpu_custom_call.1} parent=1 // pred_check
      _
    $region27: #{tpu_custom_call.1} parent=1 // pred_check_branch
      %73 = sbr.rel (0) target = $region29
    $region28: #{tpu_custom_call.1} parent=1 // pred_region
      %s75 = ssub.s32 16384, 16384
      %76 = vsyncadd [#allocation9], %s75
      %s77 = sshll.u32 [#allocation10], 4
      %s78 = int_to_ptr.vmem [resolvable:$true] %s77
      %83 = dma.hbm_to_vmem [thread:$0]  %s6, 16384, %s78, [#allocation9], 256, 256, 16
    $region29: #{tpu_custom_call.1} parent=1 // pred_fallthru
      _
    // Predicated region
    $region30: #{tpu_custom_call.1} parent=1 // pred_check
      _
    $region31: #{tpu_custom_call.1} parent=1 // pred_check_branch
      %85 = sbr.rel (0) target = $region33
    $region32: #{tpu_custom_call.1} parent=1 // pred_region
      _
    $region33: #{tpu_custom_call.1} parent=1 // pred_fallthru
      _
    // Predicated region
    $region34: #{tpu_custom_call.1} parent=1 // pred_check
      _
    $region35: #{tpu_custom_call.1} parent=1 // pred_check_branch
      %87 = sbr.rel (0) target = $region37
    $region36: #{tpu_custom_call.1} parent=1 // pred_region
      %s89 = ssub.s32 4096, 4096
      %90 = vsyncadd [#allocation12], %s89
      %s91 = sshll.u32 [#allocation11], 4
      %s92 = int_to_ptr.vmem [resolvable:$true] %s91
      %97 = dma.hbm_to_vmem [thread:$0]  %s8, 4096, %s92, [#allocation12], 64, 64, 4
    $region37: #{tpu_custom_call.1} parent=1 // pred_fallthru
      _
    // Predicated region
    $region38: #{tpu_custom_call.1} parent=1 // pred_check
      _
    $region39: #{tpu_custom_call.1} parent=1 // pred_check_branch
      %99 = sbr.rel (0) target = $region41
    $region40: #{tpu_custom_call.1} parent=1 // pred_region
      _
    $region41: #{tpu_custom_call.1} parent=1 // pred_fallthru
      _
    // Predicated region
    $region42: #{tpu_custom_call.1} parent=1 // pred_check
      _
    $region43: #{tpu_custom_call.1} parent=1 // pred_check_branch
      %101 = sbr.rel (0) target = $region45
    $region44: #{tpu_custom_call.1} parent=1 // pred_region
      %102 = dma.done [#allocation3], 256
    $region45: #{tpu_custom_call.1} parent=1 // pred_fallthru
      _
    // Predicated region
    $region46: #{tpu_custom_call.1} parent=1 // pred_check
      _
    $region47: #{tpu_custom_call.1} parent=1 // pred_check_branch
      %104 = sbr.rel (0) target = $region49
    $region48: #{tpu_custom_call.1} parent=1 // pred_region
      %105 = dma.done [#allocation6], 256
    $region49: #{tpu_custom_call.1} parent=1 // pred_fallthru
      _
    // Predicated region
    $region50: #{tpu_custom_call.1} parent=1 // pred_check
      _
    $region51: #{tpu_custom_call.1} parent=1 // pred_check_branch
      %107 = sbr.rel (0) target = $region53
    $region52: #{tpu_custom_call.1} parent=1 // pred_region
      %108 = dma.done [#allocation6], 4096
    $region53: #{tpu_custom_call.1} parent=1 // pred_fallthru
      _
    // Predicated region
    $region54: #{tpu_custom_call.1} parent=1 // pred_check
      _
    $region55: #{tpu_custom_call.1} parent=1 // pred_check_branch
      %110 = sbr.rel (0) target = $region57
    $region56: #{tpu_custom_call.1} parent=1 // pred_region
      %111 = dma.done [#allocation9], 16384
    $region57: #{tpu_custom_call.1} parent=1 // pred_fallthru
      _
    // Predicated region
    $region58: #{tpu_custom_call.1} parent=1 // pred_check
      _
    $region59: #{tpu_custom_call.1} parent=1 // pred_check_branch
      %113 = sbr.rel (0) target = $region61
    $region60: #{tpu_custom_call.1} parent=1 // pred_region
      %114 = dma.done [#allocation9], 16384
    $region61: #{tpu_custom_call.1} parent=1 // pred_fallthru
      _
    // Predicated region
    $region62: #{tpu_custom_call.1} parent=1 // pred_check
      _
    $region63: #{tpu_custom_call.1} parent=1 // pred_check_branch
      %116 = sbr.rel (0) target = $region65
    $region64: #{tpu_custom_call.1} parent=1 // pred_region
      %117 = dma.done [#allocation12], 4096
    $region65: #{tpu_custom_call.1} parent=1 // pred_fallthru
      _
    %v119 = vld [vmem:[#allocation2] sm:$0xff]
    %v120 = vld [vmem:[#allocation2 + $0x8] sm:$0xff]
    %v121 = vpack.c.bf16 %v120, %v119
    %v122 = vld [vmem:[#allocation5] sm:$0xff]
    %v123 = vld [vmem:[#allocation5 + $0x8] sm:$0xff]
    %v124 = vld [vmem:[#allocation7] sm:$0xff]
    %v125 = vld [vmem:[#allocation7 + $0x8] sm:$0xff]
    %v126 = vld [vmem:[#allocation7 + $0x10] sm:$0xff]
    %v127 = vld [vmem:[#allocation7 + $0x18] sm:$0xff]
    %v128 = vld [vmem:[#allocation7 + $0x20] sm:$0xff]
    %v129 = vld [vmem:[#allocation7 + $0x28] sm:$0xff]
    %v130 = vld [vmem:[#allocation7 + $0x30] sm:$0xff]
    %v131 = vld [vmem:[#allocation7 + $0x38] sm:$0xff]
    %v132 = vld [vmem:[#allocation7 + $0x40] sm:$0xff]
    %v133 = vld [vmem:[#allocation7 + $0x48] sm:$0xff]
    %v134 = vld [vmem:[#allocation7 + $0x50] sm:$0xff]
    %v135 = vld [vmem:[#allocation7 + $0x58] sm:$0xff]
    %v136 = vld [vmem:[#allocation7 + $0x60] sm:$0xff]
    %v137 = vld [vmem:[#allocation7 + $0x68] sm:$0xff]
    %v138 = vld [vmem:[#allocation7 + $0x70] sm:$0xff]
    %v139 = vld [vmem:[#allocation7 + $0x78] sm:$0xff]
    %v140 = vld [vmem:[#allocation7 + $0x80] sm:$0xff]
    %v141 = vld [vmem:[#allocation7 + $0x88] sm:$0xff]
    %v142 = vld [vmem:[#allocation7 + $0x90] sm:$0xff]
    %v143 = vld [vmem:[#allocation7 + $0x98] sm:$0xff]
    %v144 = vld [vmem:[#allocation7 + $0xa0] sm:$0xff]
    %v145 = vld [vmem:[#allocation7 + $0xa8] sm:$0xff]
    %v146 = vld [vmem:[#allocation7 + $0xb0] sm:$0xff]
    %v147 = vld [vmem:[#allocation7 + $0xb8] sm:$0xff]
    %v148 = vld [vmem:[#allocation7 + $0xc0] sm:$0xff]
    %v149 = vld [vmem:[#allocation7 + $0xc8] sm:$0xff]
    %v150 = vld [vmem:[#allocation7 + $0xd0] sm:$0xff]
    %v151 = vld [vmem:[#allocation7 + $0xd8] sm:$0xff]
    %v152 = vld [vmem:[#allocation7 + $0xe0] sm:$0xff]
    %v153 = vld [vmem:[#allocation7 + $0xe8] sm:$0xff]
    %v154 = vld [vmem:[#allocation7 + $0xf0] sm:$0xff]
    %v155 = vld [vmem:[#allocation7 + $0xf8] sm:$0xff]
    %v156 = vpack.c.bf16 %v123, %v122
    %vm157 = vcmask 130048
    %v159 = vsel %vm157, %v121, 0
    %161 = vmatprep.subr.bf16.mxu0 0
    %162 = vmatpush1.bf16.msra.mxu0 %v156
    %163 = vmatprep.subr.bf16.mxu0 0
    %164 = vmatpush1.bf16.msra.mxu0 0
    %165 = vmatprep.subr.bf16.mxu0 0
    %166 = vmatpush1.bf16.msra.mxu0 0
    %167 = vmatprep.subr.bf16.mxu0 0
    %168 = vmatpush1.bf16.msra.mxu0 0
    %169 = vmatprep.subr.bf16.mxu0 0
    %170 = vmatpush1.bf16.msra.mxu0 0
    %171 = vmatprep.subr.bf16.mxu0 0
    %172 = vmatpush1.bf16.msra.mxu0 0
    %173 = vmatprep.subr.bf16.mxu0 0
    %174 = vmatpush1.bf16.msra.mxu0 0
    %175 = vmatprep.subr.bf16.mxu0 0
    %176 = vmatpush1.bf16.msra.mxu0 0
    %177 = vmatprep.subr.bf16.mxu0 0
    %178 = vmatpush1.bf16.msra.mxu0 0
    %179 = vmatprep.subr.bf16.mxu0 0
    %180 = vmatpush1.bf16.msra.mxu0 0
    %181 = vmatprep.subr.bf16.mxu0 0
    %182 = vmatpush1.bf16.msra.mxu0 0
    %183 = vmatprep.subr.bf16.mxu0 0
    %184 = vmatpush1.bf16.msra.mxu0 0
    %185 = vmatprep.subr.bf16.mxu0 0
    %186 = vmatpush1.bf16.msra.mxu0 0
    %187 = vmatprep.subr.bf16.mxu0 0
    %188 = vmatpush1.bf16.msra.mxu0 0
    %189 = vmatprep.subr.bf16.mxu0 0
    %190 = vmatpush1.bf16.msra.mxu0 0
    %191 = vmatprep.subr.bf16.mxu0 0
    %192 = vmatpush1.bf16.msra.mxu0 0
    %193 = vmatprep.mubr.bf16.mxu0 0
    %194 = vmatmul.mubr.bf16.gmra.mrb[0].mxu0 %v159
    %v195 = vpop.f32.mrb[0].mxu0
    %v196 = vadd.f32 0.0, %v195
    %v197 = vpop.f32.mrb[0].mxu0
    %v198 = vpop.f32.mrb[0].mxu0
    %v199 = vadd.f32 0.0, %v198
    %v200 = vpop.f32.mrb[0].mxu0
    %201 = vdwg.mxu0
    %v202 = vpack.c.bf16 %v199, %v196
    %v203 = vld [vmem:[%s3] sm:$0xf]
    %v205 = vlaneseq
    %v206 = vshrl.u32 %v205, 7
    %v207 = vsub.s32 0, %v206
    %v208 = vrot.slane %v203, %v207
    %v209 = vlaneseq
    %v210 = vshrl.u32 %v209, 7
    %v211 = vsub.s32 1, %v210
    %v212 = vrot.slane %v203, %v211
    %v213 = vlaneseq
    %v214 = vshrl.u32 %v213, 7
    %v215 = vsub.s32 2, %v214
    %v216 = vrot.slane %v203, %v215
    %v217 = vlaneseq
    %v218 = vshrl.u32 %v217, 7
    %v219 = vsub.s32 3, %v218
    %v220 = vrot.slane %v203, %v219
    %v257 = vunpack.c.l.b16 %v124
    %v258 = vunpack.c.h.b16 %v124
    %v259 = vunpack.c.l.b16 %v125
    %v260 = vunpack.c.h.b16 %v125
    %v261 = vunpack.c.l.b16 %v126
    %v262 = vunpack.c.h.b16 %v126
    %v263 = vunpack.c.l.b16 %v127
    %v264 = vunpack.c.h.b16 %v127
    %v265 = vunpack.c.l.b16 %v128
    %v266 = vunpack.c.h.b16 %v128
    %v267 = vunpack.c.l.b16 %v129
    %v268 = vunpack.c.h.b16 %v129
    %v269 = vunpack.c.l.b16 %v130
    %v270 = vunpack.c.h.b16 %v130
    %v271 = vunpack.c.l.b16 %v131
    %v272 = vunpack.c.h.b16 %v131
    %v273 = vunpack.c.l.b16 %v132
    %v274 = vunpack.c.h.b16 %v132
    %v275 = vunpack.c.l.b16 %v133
    %v276 = vunpack.c.h.b16 %v133
    %v277 = vunpack.c.l.b16 %v134
    %v278 = vunpack.c.h.b16 %v134
    %v279 = vunpack.c.l.b16 %v135
    %v280 = vunpack.c.h.b16 %v135
    %v281 = vunpack.c.l.b16 %v136
    %v282 = vunpack.c.h.b16 %v136
    %v283 = vunpack.c.l.b16 %v137
    %v284 = vunpack.c.h.b16 %v137
    %v285 = vunpack.c.l.b16 %v138
    %v286 = vunpack.c.h.b16 %v138
    %v287 = vunpack.c.l.b16 %v139
    %v288 = vunpack.c.h.b16 %v139
    %v289 = vunpack.c.l.b16 %v140
    %v290 = vunpack.c.h.b16 %v140
    %v291 = vunpack.c.l.b16 %v141
    %v292 = vunpack.c.h.b16 %v141
    %v293 = vunpack.c.l.b16 %v142
    %v294 = vunpack.c.h.b16 %v142
    %v295 = vunpack.c.l.b16 %v143
    %v296 = vunpack.c.h.b16 %v143
    %v297 = vunpack.c.l.b16 %v144
    %v298 = vunpack.c.h.b16 %v144
    %v299 = vunpack.c.l.b16 %v145
    %v300 = vunpack.c.h.b16 %v145
    %v301 = vunpack.c.l.b16 %v146
    %v302 = vunpack.c.h.b16 %v146
    %v303 = vunpack.c.l.b16 %v147
    %v304 = vunpack.c.h.b16 %v147
    %v305 = vunpack.c.l.b16 %v148
    %v306 = vunpack.c.h.b16 %v148
    %v307 = vunpack.c.l.b16 %v149
    %v308 = vunpack.c.h.b16 %v149
    %v309 = vunpack.c.l.b16 %v150
    %v310 = vunpack.c.h.b16 %v150
    %v311 = vunpack.c.l.b16 %v151
    %v312 = vunpack.c.h.b16 %v151
    %v313 = vunpack.c.l.b16 %v152
    %v314 = vunpack.c.h.b16 %v152
    %v315 = vunpack.c.l.b16 %v153
    %v316 = vunpack.c.h.b16 %v153
    %v317 = vunpack.c.l.b16 %v154
    %v318 = vunpack.c.h.b16 %v154
    %v319 = vunpack.c.l.b16 %v155
    %v320 = vunpack.c.h.b16 %v155
    %v321 = vpack.c.b16 %v261, %v257
    %v322 = vpack.c.b16 %v262, %v258
    %v323 = vpack.c.b16 %v263, %v259
    %v324 = vpack.c.b16 %v264, %v260
    %v325 = vpack.c.b16 %v269, %v265
    %v326 = vpack.c.b16 %v270, %v266
    %v327 = vpack.c.b16 %v271, %v267
    %v328 = vpack.c.b16 %v272, %v268
    %v329 = vpack.c.b16 %v277, %v273
    %v330 = vpack.c.b16 %v278, %v274
    %v331 = vpack.c.b16 %v279, %v275
    %v332 = vpack.c.b16 %v280, %v276
    %v333 = vpack.c.b16 %v285, %v281
    %v334 = vpack.c.b16 %v286, %v282
    %v335 = vpack.c.b16 %v287, %v283
    %v336 = vpack.c.b16 %v288, %v284
    %v337 = vpack.c.b16 %v293, %v289
    %v338 = vpack.c.b16 %v294, %v290
    %v339 = vpack.c.b16 %v295, %v291
    %v340 = vpack.c.b16 %v296, %v292
    %v341 = vpack.c.b16 %v301, %v297
    %v342 = vpack.c.b16 %v302, %v298
    %v343 = vpack.c.b16 %v303, %v299
    %v344 = vpack.c.b16 %v304, %v300
    %v345 = vpack.c.b16 %v309, %v305
    %v346 = vpack.c.b16 %v310, %v306
    %v347 = vpack.c.b16 %v311, %v307
    %v348 = vpack.c.b16 %v312, %v308
    %v349 = vpack.c.b16 %v317, %v313
    %v350 = vpack.c.b16 %v318, %v314
    %v351 = vpack.c.b16 %v319, %v315
    %v352 = vpack.c.b16 %v320, %v316
    %385 = vmatprep.subr.bf16.mxu0 %v322
    %386 = vmatpush1.bf16.msra.mxu0 %v321
    %387 = vmatprep.subr.bf16.mxu0 %v326
    %388 = vmatpush1.bf16.msra.mxu0 %v325
    %389 = vmatprep.subr.bf16.mxu0 %v330
    %390 = vmatpush1.bf16.msra.mxu0 %v329
    %391 = vmatprep.subr.bf16.mxu0 %v334
    %392 = vmatpush1.bf16.msra.mxu0 %v333
    %393 = vmatprep.subr.bf16.mxu0 %v338
    %394 = vmatpush1.bf16.msra.mxu0 %v337
    %395 = vmatprep.subr.bf16.mxu0 %v342
    %396 = vmatpush1.bf16.msra.mxu0 %v341
    %397 = vmatprep.subr.bf16.mxu0 %v346
    %398 = vmatpush1.bf16.msra.mxu0 %v345
    %399 = vmatprep.subr.bf16.mxu0 %v350
    %400 = vmatpush1.bf16.msra.mxu0 %v349
    %401 = vmatprep.subr.bf16.mxu0 0
    %402 = vmatpush1.bf16.msra.mxu0 0
    %403 = vmatprep.subr.bf16.mxu0 0
    %404 = vmatpush1.bf16.msra.mxu0 0
    %405 = vmatprep.subr.bf16.mxu0 0
    %406 = vmatpush1.bf16.msra.mxu0 0
    %407 = vmatprep.subr.bf16.mxu0 0
    %408 = vmatpush1.bf16.msra.mxu0 0
    %409 = vmatprep.subr.bf16.mxu0 0
    %410 = vmatpush1.bf16.msra.mxu0 0
    %411 = vmatprep.subr.bf16.mxu0 0
    %412 = vmatpush1.bf16.msra.mxu0 0
    %413 = vmatprep.subr.bf16.mxu0 0
    %414 = vmatpush1.bf16.msra.mxu0 0
    %415 = vmatprep.subr.bf16.mxu0 0
    %416 = vmatpush1.bf16.msra.mxu0 0
    %417 = vmatprep.mubr.bf16.mxu0 0
    %418 = vmatmul.mubr.bf16.gmra.mrb[0].mxu0 %v202
    %v419 = vpop.f32.mrb[0].mxu0
    %v420 = vadd.f32 %v208, %v419
    %v421 = vpop.f32.mrb[0].mxu0
    %v422 = vadd.f32 %v212, %v421
    %v423 = vpop.f32.mrb[0].mxu0
    %v424 = vadd.f32 %v208, %v423
    %v425 = vpop.f32.mrb[0].mxu0
    %v426 = vadd.f32 %v212, %v425
    %427 = vdwg.mxu0
    %428 = vmatprep.subr.bf16.mxu0 %v324
    %429 = vmatpush1.bf16.msra.mxu0 %v323
    %430 = vmatprep.subr.bf16.mxu0 %v328
    %431 = vmatpush1.bf16.msra.mxu0 %v327
    %432 = vmatprep.subr.bf16.mxu0 %v332
    %433 = vmatpush1.bf16.msra.mxu0 %v331
    %434 = vmatprep.subr.bf16.mxu0 %v336
    %435 = vmatpush1.bf16.msra.mxu0 %v335
    %436 = vmatprep.subr.bf16.mxu0 %v340
    %437 = vmatpush1.bf16.msra.mxu0 %v339
    %438 = vmatprep.subr.bf16.mxu0 %v344
    %439 = vmatpush1.bf16.msra.mxu0 %v343
    %440 = vmatprep.subr.bf16.mxu0 %v348
    %441 = vmatpush1.bf16.msra.mxu0 %v347
    %442 = vmatprep.subr.bf16.mxu0 %v352
    %443 = vmatpush1.bf16.msra.mxu0 %v351
    %444 = vmatprep.subr.bf16.mxu0 0
    %445 = vmatpush1.bf16.msra.mxu0 0
    %446 = vmatprep.subr.bf16.mxu0 0
    %447 = vmatpush1.bf16.msra.mxu0 0
    %448 = vmatprep.subr.bf16.mxu0 0
    %449 = vmatpush1.bf16.msra.mxu0 0
    %450 = vmatprep.subr.bf16.mxu0 0
    %451 = vmatpush1.bf16.msra.mxu0 0
    %452 = vmatprep.subr.bf16.mxu0 0
    %453 = vmatpush1.bf16.msra.mxu0 0
    %454 = vmatprep.subr.bf16.mxu0 0
    %455 = vmatpush1.bf16.msra.mxu0 0
    %456 = vmatprep.subr.bf16.mxu0 0
    %457 = vmatpush1.bf16.msra.mxu0 0
    %458 = vmatprep.subr.bf16.mxu0 0
    %459 = vmatpush1.bf16.msra.mxu0 0
    %460 = vmatprep.mubr.bf16.mxu0 0
    %461 = vmatmul.mubr.bf16.gmra.mrb[0].mxu0 %v202
    %v462 = vpop.f32.mrb[0].mxu0
    %v463 = vadd.f32 %v216, %v462
    %v464 = vpop.f32.mrb[0].mxu0
    %v465 = vadd.f32 %v220, %v464
    %v466 = vpop.f32.mrb[0].mxu0
    %v467 = vadd.f32 %v216, %v466
    %v468 = vpop.f32.mrb[0].mxu0
    %v469 = vadd.f32 %v220, %v468
    %470 = vdwg.mxu0
    %v471 = vmax.f32 %v420, 0.0
    %v472 = vmax.f32 %v422, 0.0
    %v473 = vmax.f32 %v463, 0.0
    %v474 = vmax.f32 %v465, 0.0
    %v475 = vmax.f32 %v424, 0.0
    %v476 = vmax.f32 %v426, 0.0
    %v477 = vmax.f32 %v467, 0.0
    %v478 = vmax.f32 %v469, 0.0
    %v479 = vld [vmem:[#allocation8] sm:$0xff]
    %v480 = vld [vmem:[#allocation8 + $0x8] sm:$0xff]
    %v481 = vld [vmem:[#allocation8 + $0x10] sm:$0xff]
    %v482 = vld [vmem:[#allocation8 + $0x18] sm:$0xff]
    %v483 = vld [vmem:[#allocation8 + $0x20] sm:$0xff]
    %v484 = vld [vmem:[#allocation8 + $0x28] sm:$0xff]
    %v485 = vld [vmem:[#allocation8 + $0x30] sm:$0xff]
    %v486 = vld [vmem:[#allocation8 + $0x38] sm:$0xff]
    %v487 = vld [vmem:[#allocation8 + $0x40] sm:$0xff]
    %v488 = vld [vmem:[#allocation8 + $0x48] sm:$0xff]
    %v489 = vld [vmem:[#allocation8 + $0x50] sm:$0xff]
    %v490 = vld [vmem:[#allocation8 + $0x58] sm:$0xff]
    %v491 = vld [vmem:[#allocation8 + $0x60] sm:$0xff]
    %v492 = vld [vmem:[#allocation8 + $0x68] sm:$0xff]
    %v493 = vld [vmem:[#allocation8 + $0x70] sm:$0xff]
    %v494 = vld [vmem:[#allocation8 + $0x78] sm:$0xff]
    %v495 = vld [vmem:[#allocation8 + $0x80] sm:$0xff]
    %v496 = vld [vmem:[#allocation8 + $0x88] sm:$0xff]
    %v497 = vld [vmem:[#allocation8 + $0x90] sm:$0xff]
    %v498 = vld [vmem:[#allocation8 + $0x98] sm:$0xff]
    %v499 = vld [vmem:[#allocation8 + $0xa0] sm:$0xff]
    %v500 = vld [vmem:[#allocation8 + $0xa8] sm:$0xff]
    %v501 = vld [vmem:[#allocation8 + $0xb0] sm:$0xff]
    %v502 = vld [vmem:[#allocation8 + $0xb8] sm:$0xff]
    %v503 = vld [vmem:[#allocation8 + $0xc0] sm:$0xff]
    %v504 = vld [vmem:[#allocation8 + $0xc8] sm:$0xff]
    %v505 = vld [vmem:[#allocation8 + $0xd0] sm:$0xff]
    %v506 = vld [vmem:[#allocation8 + $0xd8] sm:$0xff]
    %v507 = vld [vmem:[#allocation8 + $0xe0] sm:$0xff]
    %v508 = vld [vmem:[#allocation8 + $0xe8] sm:$0xff]
    %v509 = vld [vmem:[#allocation8 + $0xf0] sm:$0xff]
    %v510 = vld [vmem:[#allocation8 + $0xf8] sm:$0xff]
    %v511 = vld [vmem:[#allocation8 + $0x100] sm:$0xff]
    %v512 = vld [vmem:[#allocation8 + $0x108] sm:$0xff]
    %v513 = vld [vmem:[#allocation8 + $0x110] sm:$0xff]
    %v514 = vld [vmem:[#allocation8 + $0x118] sm:$0xff]
    %v515 = vld [vmem:[#allocation8 + $0x120] sm:$0xff]
    %v516 = vld [vmem:[#allocation8 + $0x128] sm:$0xff]
    %v517 = vld [vmem:[#allocation8 + $0x130] sm:$0xff]
    %v518 = vld [vmem:[#allocation8 + $0x138] sm:$0xff]
    %v519 = vld [vmem:[#allocation8 + $0x140] sm:$0xff]
    %v520 = vld [vmem:[#allocation8 + $0x148] sm:$0xff]
    %v521 = vld [vmem:[#allocation8 + $0x150] sm:$0xff]
    %v522 = vld [vmem:[#allocation8 + $0x158] sm:$0xff]
    %v523 = vld [vmem:[#allocation8 + $0x160] sm:$0xff]
    %v524 = vld [vmem:[#allocation8 + $0x168] sm:$0xff]
    %v525 = vld [vmem:[#allocation8 + $0x170] sm:$0xff]
    %v526 = vld [vmem:[#allocation8 + $0x178] sm:$0xff]
    %v527 = vld [vmem:[#allocation8 + $0x180] sm:$0xff]
    %v528 = vld [vmem:[#allocation8 + $0x188] sm:$0xff]
    %v529 = vld [vmem:[#allocation8 + $0x190] sm:$0xff]
    %v530 = vld [vmem:[#allocation8 + $0x198] sm:$0xff]
    %v531 = vld [vmem:[#allocation8 + $0x1a0] sm:$0xff]
    %v532 = vld [vmem:[#allocation8 + $0x1a8] sm:$0xff]
    %v533 = vld [vmem:[#allocation8 + $0x1b0] sm:$0xff]
    %v534 = vld [vmem:[#allocation8 + $0x1b8] sm:$0xff]
    %v535 = vld [vmem:[#allocation8 + $0x1c0] sm:$0xff]
    %v536 = vld [vmem:[#allocation8 + $0x1c8] sm:$0xff]
    %v537 = vld [vmem:[#allocation8 + $0x1d0] sm:$0xff]
    %v538 = vld [vmem:[#allocation8 + $0x1d8] sm:$0xff]
    %v539 = vld [vmem:[#allocation8 + $0x1e0] sm:$0xff]
    %v540 = vld [vmem:[#allocation8 + $0x1e8] sm:$0xff]
    %v541 = vld [vmem:[#allocation8 + $0x1f0] sm:$0xff]
    %v542 = vld [vmem:[#allocation8 + $0x1f8] sm:$0xff]
    %v543 = vld [vmem:[#allocation8 + $0x200] sm:$0xff]
    %v544 = vld [vmem:[#allocation8 + $0x208] sm:$0xff]
    %v545 = vld [vmem:[#allocation8 + $0x210] sm:$0xff]
    %v546 = vld [vmem:[#allocation8 + $0x218] sm:$0xff]
    %v547 = vld [vmem:[#allocation8 + $0x220] sm:$0xff]
    %v548 = vld [vmem:[#allocation8 + $0x228] sm:$0xff]
    %v549 = vld [vmem:[#allocation8 + $0x230] sm:$0xff]
    %v550 = vld [vmem:[#allocation8 + $0x238] sm:$0xff]
    %v551 = vld [vmem:[#allocation8 + $0x240] sm:$0xff]
    %v552 = vld [vmem:[#allocation8 + $0x248] sm:$0xff]
    %v553 = vld [vmem:[#allocation8 + $0x250] sm:$0xff]
    %v554 = vld [vmem:[#allocation8 + $0x258] sm:$0xff]
    %v555 = vld [vmem:[#allocation8 + $0x260] sm:$0xff]
    %v556 = vld [vmem:[#allocation8 + $0x268] sm:$0xff]
    %v557 = vld [vmem:[#allocation8 + $0x270] sm:$0xff]
    %v558 = vld [vmem:[#allocation8 + $0x278] sm:$0xff]
    %v559 = vld [vmem:[#allocation8 + $0x280] sm:$0xff]
    %v560 = vld [vmem:[#allocation8 + $0x288] sm:$0xff]
    %v561 = vld [vmem:[#allocation8 + $0x290] sm:$0xff]
    %v562 = vld [vmem:[#allocation8 + $0x298] sm:$0xff]
    %v563 = vld [vmem:[#allocation8 + $0x2a0] sm:$0xff]
    %v564 = vld [vmem:[#allocation8 + $0x2a8] sm:$0xff]
    %v565 = vld [vmem:[#allocation8 + $0x2b0] sm:$0xff]
    %v566 = vld [vmem:[#allocation8 + $0x2b8] sm:$0xff]
    %v567 = vld [vmem:[#allocation8 + $0x2c0] sm:$0xff]
    %v568 = vld [vmem:[#allocation8 + $0x2c8] sm:$0xff]
    %v569 = vld [vmem:[#allocation8 + $0x2d0] sm:$0xff]
    %v570 = vld [vmem:[#allocation8 + $0x2d8] sm:$0xff]
    %v571 = vld [vmem:[#allocation8 + $0x2e0] sm:$0xff]
    %v572 = vld [vmem:[#allocation8 + $0x2e8] sm:$0xff]
    %v573 = vld [vmem:[#allocation8 + $0x2f0] sm:$0xff]
    %v574 = vld [vmem:[#allocation8 + $0x2f8] sm:$0xff]
    %v575 = vld [vmem:[#allocation8 + $0x300] sm:$0xff]
    %v576 = vld [vmem:[#allocation8 + $0x308] sm:$0xff]
    %v577 = vld [vmem:[#allocation8 + $0x310] sm:$0xff]
    %v578 = vld [vmem:[#allocation8 + $0x318] sm:$0xff]
    %v579 = vld [vmem:[#allocation8 + $0x320] sm:$0xff]
    %v580 = vld [vmem:[#allocation8 + $0x328] sm:$0xff]
    %v581 = vld [vmem:[#allocation8 + $0x330] sm:$0xff]
    %v582 = vld [vmem:[#allocation8 + $0x338] sm:$0xff]
    %v583 = vld [vmem:[#allocation8 + $0x340] sm:$0xff]
    %v584 = vld [vmem:[#allocation8 + $0x348] sm:$0xff]
    %v585 = vld [vmem:[#allocation8 + $0x350] sm:$0xff]
    %v586 = vld [vmem:[#allocation8 + $0x358] sm:$0xff]
    %v587 = vld [vmem:[#allocation8 + $0x360] sm:$0xff]
    %v588 = vld [vmem:[#allocation8 + $0x368] sm:$0xff]
    %v589 = vld [vmem:[#allocation8 + $0x370] sm:$0xff]
    %v590 = vld [vmem:[#allocation8 + $0x378] sm:$0xff]
    %v591 = vld [vmem:[#allocation8 + $0x380] sm:$0xff]
    %v592 = vld [vmem:[#allocation8 + $0x388] sm:$0xff]
    %v593 = vld [vmem:[#allocation8 + $0x390] sm:$0xff]
    %v594 = vld [vmem:[#allocation8 + $0x398] sm:$0xff]
    %v595 = vld [vmem:[#allocation8 + $0x3a0] sm:$0xff]
    %v596 = vld [vmem:[#allocation8 + $0x3a8] sm:$0xff]
    %v597 = vld [vmem:[#allocation8 + $0x3b0] sm:$0xff]
    %v598 = vld [vmem:[#allocation8 + $0x3b8] sm:$0xff]
    %v599 = vld [vmem:[#allocation8 + $0x3c0] sm:$0xff]
    %v600 = vld [vmem:[#allocation8 + $0x3c8] sm:$0xff]
    %v601 = vld [vmem:[#allocation8 + $0x3d0] sm:$0xff]
    %v602 = vld [vmem:[#allocation8 + $0x3d8] sm:$0xff]
    %v603 = vld [vmem:[#allocation8 + $0x3e0] sm:$0xff]
    %v604 = vld [vmem:[#allocation8 + $0x3e8] sm:$0xff]
    %v605 = vld [vmem:[#allocation8 + $0x3f0] sm:$0xff]
    %v606 = vld [vmem:[#allocation8 + $0x3f8] sm:$0xff]
    %v607 = vpack.c.bf16 %v475, %v471
    %v608 = vpack.c.bf16 %v476, %v472
    %v609 = vpack.c.bf16 %v477, %v473
    %v610 = vpack.c.bf16 %v478, %v474
    %611 = vmatprep.subr.bf16.mxu0 %v608
    %612 = vmatpush1.bf16.msra.mxu0 %v607
    %613 = vmatprep.subr.bf16.mxu0 0
    %614 = vmatpush1.bf16.msra.mxu0 0
    %615 = vmatprep.subr.bf16.mxu0 0
    %616 = vmatpush1.bf16.msra.mxu0 0
    %617 = vmatprep.subr.bf16.mxu0 0
    %618 = vmatpush1.bf16.msra.mxu0 0
    %619 = vmatprep.subr.bf16.mxu0 0
    %620 = vmatpush1.bf16.msra.mxu0 0
    %621 = vmatprep.subr.bf16.mxu0 0
    %622 = vmatpush1.bf16.msra.mxu0 0
    %623 = vmatprep.subr.bf16.mxu0 0
    %624 = vmatpush1.bf16.msra.mxu0 0
    %625 = vmatprep.subr.bf16.mxu0 0
    %626 = vmatpush1.bf16.msra.mxu0 0
    %627 = vmatprep.subr.bf16.mxu0 0
    %628 = vmatpush1.bf16.msra.mxu0 0
    %629 = vmatprep.subr.bf16.mxu0 0
    %630 = vmatpush1.bf16.msra.mxu0 0
    %631 = vmatprep.subr.bf16.mxu0 0
    %632 = vmatpush1.bf16.msra.mxu0 0
    %633 = vmatprep.subr.bf16.mxu0 0
    %634 = vmatpush1.bf16.msra.mxu0 0
    %635 = vmatprep.subr.bf16.mxu0 0
    %636 = vmatpush1.bf16.msra.mxu0 0
    %637 = vmatprep.subr.bf16.mxu0 0
    %638 = vmatpush1.bf16.msra.mxu0 0
    %639 = vmatprep.subr.bf16.mxu0 0
    %640 = vmatpush1.bf16.msra.mxu0 0
    %641 = vmatprep.subr.bf16.mxu0 0
    %642 = vmatpush1.bf16.msra.mxu0 0
    %643 = vmatprep.mubr.bf16.mxu0 0
    %644 = vmatmul.mubr.bf16.gmra.mrb[0].mxu0 %v159
    %v645 = vpop.f32.mrb[0].mxu0
    %v646 = vadd.f32 0.0, %v645
    %v647 = vpop.f32.mrb[0].mxu0
    %v648 = vadd.f32 0.0, %v647
    %v649 = vpop.f32.mrb[0].mxu0
    %v650 = vadd.f32 0.0, %v649
    %v651 = vpop.f32.mrb[0].mxu0
    %v652 = vadd.f32 0.0, %v651
    %653 = vdwg.mxu0
    %654 = vmatprep.subr.bf16.mxu0 %v610
    %655 = vmatpush1.bf16.msra.mxu0 %v609
    %656 = vmatprep.subr.bf16.mxu0 0
    %657 = vmatpush1.bf16.msra.mxu0 0
    %658 = vmatprep.subr.bf16.mxu0 0
    %659 = vmatpush1.bf16.msra.mxu0 0
    %660 = vmatprep.subr.bf16.mxu0 0
    %661 = vmatpush1.bf16.msra.mxu0 0
    %662 = vmatprep.subr.bf16.mxu0 0
    %663 = vmatpush1.bf16.msra.mxu0 0
    %664 = vmatprep.subr.bf16.mxu0 0
    %665 = vmatpush1.bf16.msra.mxu0 0
    %666 = vmatprep.subr.bf16.mxu0 0
    %667 = vmatpush1.bf16.msra.mxu0 0
    %668 = vmatprep.subr.bf16.mxu0 0
    %669 = vmatpush1.bf16.msra.mxu0 0
    %670 = vmatprep.subr.bf16.mxu0 0
    %671 = vmatpush1.bf16.msra.mxu0 0
    %672 = vmatprep.subr.bf16.mxu0 0
    %673 = vmatpush1.bf16.msra.mxu0 0
    %674 = vmatprep.subr.bf16.mxu0 0
    %675 = vmatpush1.bf16.msra.mxu0 0
    %676 = vmatprep.subr.bf16.mxu0 0
    %677 = vmatpush1.bf16.msra.mxu0 0
    %678 = vmatprep.subr.bf16.mxu0 0
    %679 = vmatpush1.bf16.msra.mxu0 0
    %680 = vmatprep.subr.bf16.mxu0 0
    %681 = vmatpush1.bf16.msra.mxu0 0
    %682 = vmatprep.subr.bf16.mxu0 0
    %683 = vmatpush1.bf16.msra.mxu0 0
    %684 = vmatprep.subr.bf16.mxu0 0
    %685 = vmatpush1.bf16.msra.mxu0 0
    %686 = vmatprep.mubr.bf16.mxu0 0
    %687 = vmatmul.mubr.bf16.gmra.mrb[0].mxu0 %v159
    %v688 = vpop.f32.mrb[0].mxu0
    %v689 = vadd.f32 0.0, %v688
    %v690 = vpop.f32.mrb[0].mxu0
    %v691 = vadd.f32 0.0, %v690
    %v692 = vpop.f32.mrb[0].mxu0
    %v693 = vadd.f32 0.0, %v692
    %v694 = vpop.f32.mrb[0].mxu0
    %v695 = vadd.f32 0.0, %v694
    %696 = vdwg.mxu0
    %v697 = vpack.c.bf16 %v650, %v646
    %v698 = vpack.c.bf16 %v652, %v648
    %v699 = vpack.c.bf16 %v693, %v689
    %v700 = vpack.c.bf16 %v695, %v691
    %v701 = vld [vmem:[%s5] sm:$0xf]
    %v703 = vlaneseq
    %v704 = vshrl.u32 %v703, 7
    %v705 = vsub.s32 0, %v704
    %v706 = vrot.slane %v701, %v705
    %v707 = vlaneseq
    %v708 = vshrl.u32 %v707, 7
    %v709 = vsub.s32 1, %v708
    %v710 = vrot.slane %v701, %v709
    %v711 = vlaneseq
    %v712 = vshrl.u32 %v711, 7
    %v713 = vsub.s32 2, %v712
    %v714 = vrot.slane %v701, %v713
    %v715 = vlaneseq
    %v716 = vshrl.u32 %v715, 7
    %v717 = vsub.s32 3, %v716
    %v718 = vrot.slane %v701, %v717
    %v851 = vunpack.c.l.b16 %v479
    %v852 = vunpack.c.h.b16 %v479
    %v853 = vunpack.c.l.b16 %v480
    %v854 = vunpack.c.h.b16 %v480
    %v855 = vunpack.c.l.b16 %v481
    %v856 = vunpack.c.h.b16 %v481
    %v857 = vunpack.c.l.b16 %v482
    %v858 = vunpack.c.h.b16 %v482
    %v859 = vunpack.c.l.b16 %v483
    %v860 = vunpack.c.h.b16 %v483
    %v861 = vunpack.c.l.b16 %v484
    %v862 = vunpack.c.h.b16 %v484
    %v863 = vunpack.c.l.b16 %v485
    %v864 = vunpack.c.h.b16 %v485
    %v865 = vunpack.c.l.b16 %v486
    %v866 = vunpack.c.h.b16 %v486
    %v867 = vunpack.c.l.b16 %v487
    %v868 = vunpack.c.h.b16 %v487
    %v869 = vunpack.c.l.b16 %v488
    %v870 = vunpack.c.h.b16 %v488
    %v871 = vunpack.c.l.b16 %v489
    %v872 = vunpack.c.h.b16 %v489
    %v873 = vunpack.c.l.b16 %v490
    %v874 = vunpack.c.h.b16 %v490
    %v875 = vunpack.c.l.b16 %v491
    %v876 = vunpack.c.h.b16 %v491
    %v877 = vunpack.c.l.b16 %v492
    %v878 = vunpack.c.h.b16 %v492
    %v879 = vunpack.c.l.b16 %v493
    %v880 = vunpack.c.h.b16 %v493
    %v881 = vunpack.c.l.b16 %v494
    %v882 = vunpack.c.h.b16 %v494
    %v883 = vunpack.c.l.b16 %v495
    %v884 = vunpack.c.h.b16 %v495
    %v885 = vunpack.c.l.b16 %v496
    %v886 = vunpack.c.h.b16 %v496
    %v887 = vunpack.c.l.b16 %v497
    %v888 = vunpack.c.h.b16 %v497
    %v889 = vunpack.c.l.b16 %v498
    %v890 = vunpack.c.h.b16 %v498
    %v891 = vunpack.c.l.b16 %v499
    %v892 = vunpack.c.h.b16 %v499
    %v893 = vunpack.c.l.b16 %v500
    %v894 = vunpack.c.h.b16 %v500
    %v895 = vunpack.c.l.b16 %v501
    %v896 = vunpack.c.h.b16 %v501
    %v897 = vunpack.c.l.b16 %v502
    %v898 = vunpack.c.h.b16 %v502
    %v899 = vunpack.c.l.b16 %v503
    %v900 = vunpack.c.h.b16 %v503
    %v901 = vunpack.c.l.b16 %v504
    %v902 = vunpack.c.h.b16 %v504
    %v903 = vunpack.c.l.b16 %v505
    %v904 = vunpack.c.h.b16 %v505
    %v905 = vunpack.c.l.b16 %v506
    %v906 = vunpack.c.h.b16 %v506
    %v907 = vunpack.c.l.b16 %v507
    %v908 = vunpack.c.h.b16 %v507
    %v909 = vunpack.c.l.b16 %v508
    %v910 = vunpack.c.h.b16 %v508
    %v911 = vunpack.c.l.b16 %v509
    %v912 = vunpack.c.h.b16 %v509
    %v913 = vunpack.c.l.b16 %v510
    %v914 = vunpack.c.h.b16 %v510
    %v915 = vunpack.c.l.b16 %v511
    %v916 = vunpack.c.h.b16 %v511
    %v917 = vunpack.c.l.b16 %v512
    %v918 = vunpack.c.h.b16 %v512
    %v919 = vunpack.c.l.b16 %v513
    %v920 = vunpack.c.h.b16 %v513
    %v921 = vunpack.c.l.b16 %v514
    %v922 = vunpack.c.h.b16 %v514
    %v923 = vunpack.c.l.b16 %v515
    %v924 = vunpack.c.h.b16 %v515
    %v925 = vunpack.c.l.b16 %v516
    %v926 = vunpack.c.h.b16 %v516
    %v927 = vunpack.c.l.b16 %v517
    %v928 = vunpack.c.h.b16 %v517
    %v929 = vunpack.c.l.b16 %v518
    %v930 = vunpack.c.h.b16 %v518
    %v931 = vunpack.c.l.b16 %v519
    %v932 = vunpack.c.h.b16 %v519
    %v933 = vunpack.c.l.b16 %v520
    %v934 = vunpack.c.h.b16 %v520
    %v935 = vunpack.c.l.b16 %v521
    %v936 = vunpack.c.h.b16 %v521
    %v937 = vunpack.c.l.b16 %v522
    %v938 = vunpack.c.h.b16 %v522
    %v939 = vunpack.c.l.b16 %v523
    %v940 = vunpack.c.h.b16 %v523
    %v941 = vunpack.c.l.b16 %v524
    %v942 = vunpack.c.h.b16 %v524
    %v943 = vunpack.c.l.b16 %v525
    %v944 = vunpack.c.h.b16 %v525
    %v945 = vunpack.c.l.b16 %v526
    %v946 = vunpack.c.h.b16 %v526
    %v947 = vunpack.c.l.b16 %v527
    %v948 = vunpack.c.h.b16 %v527
    %v949 = vunpack.c.l.b16 %v528
    %v950 = vunpack.c.h.b16 %v528
    %v951 = vunpack.c.l.b16 %v529
    %v952 = vunpack.c.h.b16 %v529
    %v953 = vunpack.c.l.b16 %v530
    %v954 = vunpack.c.h.b16 %v530
    %v955 = vunpack.c.l.b16 %v531
    %v956 = vunpack.c.h.b16 %v531
    %v957 = vunpack.c.l.b16 %v532
    %v958 = vunpack.c.h.b16 %v532
    %v959 = vunpack.c.l.b16 %v533
    %v960 = vunpack.c.h.b16 %v533
    %v961 = vunpack.c.l.b16 %v534
    %v962 = vunpack.c.h.b16 %v534
    %v963 = vunpack.c.l.b16 %v535
    %v964 = vunpack.c.h.b16 %v535
    %v965 = vunpack.c.l.b16 %v536
    %v966 = vunpack.c.h.b16 %v536
    %v967 = vunpack.c.l.b16 %v537
    %v968 = vunpack.c.h.b16 %v537
    %v969 = vunpack.c.l.b16 %v538
    %v970 = vunpack.c.h.b16 %v538
    %v971 = vunpack.c.l.b16 %v539
    %v972 = vunpack.c.h.b16 %v539
    %v973 = vunpack.c.l.b16 %v540
    %v974 = vunpack.c.h.b16 %v540
    %v975 = vunpack.c.l.b16 %v541
    %v976 = vunpack.c.h.b16 %v541
    %v977 = vunpack.c.l.b16 %v542
    %v978 = vunpack.c.h.b16 %v542
    %v979 = vunpack.c.l.b16 %v543
    %v980 = vunpack.c.h.b16 %v543
    %v981 = vunpack.c.l.b16 %v544
    %v982 = vunpack.c.h.b16 %v544
    %v983 = vunpack.c.l.b16 %v545
    %v984 = vunpack.c.h.b16 %v545
    %v985 = vunpack.c.l.b16 %v546
    %v986 = vunpack.c.h.b16 %v546
    %v987 = vunpack.c.l.b16 %v547
    %v988 = vunpack.c.h.b16 %v547
    %v989 = vunpack.c.l.b16 %v548
    %v990 = vunpack.c.h.b16 %v548
    %v991 = vunpack.c.l.b16 %v549
    %v992 = vunpack.c.h.b16 %v549
    %v993 = vunpack.c.l.b16 %v550
    %v994 = vunpack.c.h.b16 %v550
    %v995 = vunpack.c.l.b16 %v551
    %v996 = vunpack.c.h.b16 %v551
    %v997 = vunpack.c.l.b16 %v552
    %v998 = vunpack.c.h.b16 %v552
    %v999 = vunpack.c.l.b16 %v553
    %v1000 = vunpack.c.h.b16 %v553
    %v1001 = vunpack.c.l.b16 %v554
    %v1002 = vunpack.c.h.b16 %v554
    %v1003 = vunpack.c.l.b16 %v555
    %v1004 = vunpack.c.h.b16 %v555
    %v1005 = vunpack.c.l.b16 %v556
    %v1006 = vunpack.c.h.b16 %v556
    %v1007 = vunpack.c.l.b16 %v557
    %v1008 = vunpack.c.h.b16 %v557
    %v1009 = vunpack.c.l.b16 %v558
    %v1010 = vunpack.c.h.b16 %v558
    %v1011 = vunpack.c.l.b16 %v559
    %v1012 = vunpack.c.h.b16 %v559
    %v1013 = vunpack.c.l.b16 %v560
    %v1014 = vunpack.c.h.b16 %v560
    %v1015 = vunpack.c.l.b16 %v561
    %v1016 = vunpack.c.h.b16 %v561
    %v1017 = vunpack.c.l.b16 %v562
    %v1018 = vunpack.c.h.b16 %v562
    %v1019 = vunpack.c.l.b16 %v563
    %v1020 = vunpack.c.h.b16 %v563
    %v1021 = vunpack.c.l.b16 %v564
    %v1022 = vunpack.c.h.b16 %v564
    %v1023 = vunpack.c.l.b16 %v565
    %v1024 = vunpack.c.h.b16 %v565
    %v1025 = vunpack.c.l.b16 %v566
    %v1026 = vunpack.c.h.b16 %v566
    %v1027 = vunpack.c.l.b16 %v567
    %v1028 = vunpack.c.h.b16 %v567
    %v1029 = vunpack.c.l.b16 %v568
    %v1030 = vunpack.c.h.b16 %v568
    %v1031 = vunpack.c.l.b16 %v569
    %v1032 = vunpack.c.h.b16 %v569
    %v1033 = vunpack.c.l.b16 %v570
    %v1034 = vunpack.c.h.b16 %v570
    %v1035 = vunpack.c.l.b16 %v571
    %v1036 = vunpack.c.h.b16 %v571
    %v1037 = vunpack.c.l.b16 %v572
    %v1038 = vunpack.c.h.b16 %v572
    %v1039 = vunpack.c.l.b16 %v573
    %v1040 = vunpack.c.h.b16 %v573
    %v1041 = vunpack.c.l.b16 %v574
    %v1042 = vunpack.c.h.b16 %v574
    %v1043 = vunpack.c.l.b16 %v575
    %v1044 = vunpack.c.h.b16 %v575
    %v1045 = vunpack.c.l.b16 %v576
    %v1046 = vunpack.c.h.b16 %v576
    %v1047 = vunpack.c.l.b16 %v577
    %v1048 = vunpack.c.h.b16 %v577
    %v1049 = vunpack.c.l.b16 %v578
    %v1050 = vunpack.c.h.b16 %v578
    %v1051 = vunpack.c.l.b16 %v579
    %v1052 = vunpack.c.h.b16 %v579
    %v1053 = vunpack.c.l.b16 %v580
    %v1054 = vunpack.c.h.b16 %v580
    %v1055 = vunpack.c.l.b16 %v581
    %v1056 = vunpack.c.h.b16 %v581
    %v1057 = vunpack.c.l.b16 %v582
    %v1058 = vunpack.c.h.b16 %v582
    %v1059 = vunpack.c.l.b16 %v583
    %v1060 = vunpack.c.h.b16 %v583
    %v1061 = vunpack.c.l.b16 %v584
    %v1062 = vunpack.c.h.b16 %v584
    %v1063 = vunpack.c.l.b16 %v585
    %v1064 = vunpack.c.h.b16 %v585
    %v1065 = vunpack.c.l.b16 %v586
    %v1066 = vunpack.c.h.b16 %v586
    %v1067 = vunpack.c.l.b16 %v587
    %v1068 = vunpack.c.h.b16 %v587
    %v1069 = vunpack.c.l.b16 %v588
    %v1070 = vunpack.c.h.b16 %v588
    %v1071 = vunpack.c.l.b16 %v589
    %v1072 = vunpack.c.h.b16 %v589
    %v1073 = vunpack.c.l.b16 %v590
    %v1074 = vunpack.c.h.b16 %v590
    %v1075 = vunpack.c.l.b16 %v591
    %v1076 = vunpack.c.h.b16 %v591
    %v1077 = vunpack.c.l.b16 %v592
    %v1078 = vunpack.c.h.b16 %v592
    %v1079 = vunpack.c.l.b16 %v593
    %v1080 = vunpack.c.h.b16 %v593
    %v1081 = vunpack.c.l.b16 %v594
    %v1082 = vunpack.c.h.b16 %v594
    %v1083 = vunpack.c.l.b16 %v595
    %v1084 = vunpack.c.h.b16 %v595
    %v1085 = vunpack.c.l.b16 %v596
    %v1086 = vunpack.c.h.b16 %v596
    %v1087 = vunpack.c.l.b16 %v597
    %v1088 = vunpack.c.h.b16 %v597
    %v1089 = vunpack.c.l.b16 %v598
    %v1090 = vunpack.c.h.b16 %v598
    %v1091 = vunpack.c.l.b16 %v599
    %v1092 = vunpack.c.h.b16 %v599
    %v1093 = vunpack.c.l.b16 %v600
    %v1094 = vunpack.c.h.b16 %v600
    %v1095 = vunpack.c.l.b16 %v601
    %v1096 = vunpack.c.h.b16 %v601
    %v1097 = vunpack.c.l.b16 %v602
    %v1098 = vunpack.c.h.b16 %v602
    %v1099 = vunpack.c.l.b16 %v603
    %v1100 = vunpack.c.h.b16 %v603
    %v1101 = vunpack.c.l.b16 %v604
    %v1102 = vunpack.c.h.b16 %v604
    %v1103 = vunpack.c.l.b16 %v605
    %v1104 = vunpack.c.h.b16 %v605
    %v1105 = vunpack.c.l.b16 %v606
    %v1106 = vunpack.c.h.b16 %v606
    %v1107 = vpack.c.b16 %v855, %v851
    %v1108 = vpack.c.b16 %v856, %v852
    %v1109 = vpack.c.b16 %v857, %v853
    %v1110 = vpack.c.b16 %v858, %v854
    %v1111 = vpack.c.b16 %v863, %v859
    %v1112 = vpack.c.b16 %v864, %v860
    %v1113 = vpack.c.b16 %v865, %v861
    %v1114 = vpack.c.b16 %v866, %v862
    %v1115 = vpack.c.b16 %v871, %v867
    %v1116 = vpack.c.b16 %v872, %v868
    %v1117 = vpack.c.b16 %v873, %v869
    %v1118 = vpack.c.b16 %v874, %v870
    %v1119 = vpack.c.b16 %v879, %v875
    %v1120 = vpack.c.b16 %v880, %v876
    %v1121 = vpack.c.b16 %v881, %v877
    %v1122 = vpack.c.b16 %v882, %v878
    %v1123 = vpack.c.b16 %v887, %v883
    %v1124 = vpack.c.b16 %v888, %v884
    %v1125 = vpack.c.b16 %v889, %v885
    %v1126 = vpack.c.b16 %v890, %v886
    %v1127 = vpack.c.b16 %v895, %v891
    %v1128 = vpack.c.b16 %v896, %v892
    %v1129 = vpack.c.b16 %v897, %v893
    %v1130 = vpack.c.b16 %v898, %v894
    %v1131 = vpack.c.b16 %v903, %v899
    %v1132 = vpack.c.b16 %v904, %v900
    %v1133 = vpack.c.b16 %v905, %v901
    %v1134 = vpack.c.b16 %v906, %v902
    %v1135 = vpack.c.b16 %v911, %v907
    %v1136 = vpack.c.b16 %v912, %v908
    %v1137 = vpack.c.b16 %v913, %v909
    %v1138 = vpack.c.b16 %v914, %v910
    %v1139 = vpack.c.b16 %v919, %v915
    %v1140 = vpack.c.b16 %v920, %v916
    %v1141 = vpack.c.b16 %v921, %v917
    %v1142 = vpack.c.b16 %v922, %v918
    %v1143 = vpack.c.b16 %v927, %v923
    %v1144 = vpack.c.b16 %v928, %v924
    %v1145 = vpack.c.b16 %v929, %v925
    %v1146 = vpack.c.b16 %v930, %v926
    %v1147 = vpack.c.b16 %v935, %v931
    %v1148 = vpack.c.b16 %v936, %v932
    %v1149 = vpack.c.b16 %v937, %v933
    %v1150 = vpack.c.b16 %v938, %v934
    %v1151 = vpack.c.b16 %v943, %v939
    %v1152 = vpack.c.b16 %v944, %v940
    %v1153 = vpack.c.b16 %v945, %v941
    %v1154 = vpack.c.b16 %v946, %v942
    %v1155 = vpack.c.b16 %v951, %v947
    %v1156 = vpack.c.b16 %v952, %v948
    %v1157 = vpack.c.b16 %v953, %v949
    %v1158 = vpack.c.b16 %v954, %v950
    %v1159 = vpack.c.b16 %v959, %v955
    %v1160 = vpack.c.b16 %v960, %v956
    %v1161 = vpack.c.b16 %v961, %v957
    %v1162 = vpack.c.b16 %v962, %v958
    %v1163 = vpack.c.b16 %v967, %v963
    %v1164 = vpack.c.b16 %v968, %v964
    %v1165 = vpack.c.b16 %v969, %v965
    %v1166 = vpack.c.b16 %v970, %v966
    %v1167 = vpack.c.b16 %v975, %v971
    %v1168 = vpack.c.b16 %v976, %v972
    %v1169 = vpack.c.b16 %v977, %v973
    %v1170 = vpack.c.b16 %v978, %v974
    %v1171 = vpack.c.b16 %v983, %v979
    %v1172 = vpack.c.b16 %v984, %v980
    %v1173 = vpack.c.b16 %v985, %v981
    %v1174 = vpack.c.b16 %v986, %v982
    %v1175 = vpack.c.b16 %v991, %v987
    %v1176 = vpack.c.b16 %v992, %v988
    %v1177 = vpack.c.b16 %v993, %v989
    %v1178 = vpack.c.b16 %v994, %v990
    %v1179 = vpack.c.b16 %v999, %v995
    %v1180 = vpack.c.b16 %v1000, %v996
    %v1181 = vpack.c.b16 %v1001, %v997
    %v1182 = vpack.c.b16 %v1002, %v998
    %v1183 = vpack.c.b16 %v1007, %v1003
    %v1184 = vpack.c.b16 %v1008, %v1004
    %v1185 = vpack.c.b16 %v1009, %v1005
    %v1186 = vpack.c.b16 %v1010, %v1006
    %v1187 = vpack.c.b16 %v1015, %v1011
    %v1188 = vpack.c.b16 %v1016, %v1012
    %v1189 = vpack.c.b16 %v1017, %v1013
    %v1190 = vpack.c.b16 %v1018, %v1014
    %v1191 = vpack.c.b16 %v1023, %v1019
    %v1192 = vpack.c.b16 %v1024, %v1020
    %v1193 = vpack.c.b16 %v1025, %v1021
    %v1194 = vpack.c.b16 %v1026, %v1022
    %v1195 = vpack.c.b16 %v1031, %v1027
    %v1196 = vpack.c.b16 %v1032, %v1028
    %v1197 = vpack.c.b16 %v1033, %v1029
    %v1198 = vpack.c.b16 %v1034, %v1030
    %v1199 = vpack.c.b16 %v1039, %v1035
    %v1200 = vpack.c.b16 %v1040, %v1036
    %v1201 = vpack.c.b16 %v1041, %v1037
    %v1202 = vpack.c.b16 %v1042, %v1038
    %v1203 = vpack.c.b16 %v1047, %v1043
    %v1204 = vpack.c.b16 %v1048, %v1044
    %v1205 = vpack.c.b16 %v1049, %v1045
    %v1206 = vpack.c.b16 %v1050, %v1046
    %v1207 = vpack.c.b16 %v1055, %v1051
    %v1208 = vpack.c.b16 %v1056, %v1052
    %v1209 = vpack.c.b16 %v1057, %v1053
    %v1210 = vpack.c.b16 %v1058, %v1054
    %v1211 = vpack.c.b16 %v1063, %v1059
    %v1212 = vpack.c.b16 %v1064, %v1060
    %v1213 = vpack.c.b16 %v1065, %v1061
    %v1214 = vpack.c.b16 %v1066, %v1062
    %v1215 = vpack.c.b16 %v1071, %v1067
    %v1216 = vpack.c.b16 %v1072, %v1068
    %v1217 = vpack.c.b16 %v1073, %v1069
    %v1218 = vpack.c.b16 %v1074, %v1070
    %v1219 = vpack.c.b16 %v1079, %v1075
    %v1220 = vpack.c.b16 %v1080, %v1076
    %v1221 = vpack.c.b16 %v1081, %v1077
    %v1222 = vpack.c.b16 %v1082, %v1078
    %v1223 = vpack.c.b16 %v1087, %v1083
    %v1224 = vpack.c.b16 %v1088, %v1084
    %v1225 = vpack.c.b16 %v1089, %v1085
    %v1226 = vpack.c.b16 %v1090, %v1086
    %v1227 = vpack.c.b16 %v1095, %v1091
    %v1228 = vpack.c.b16 %v1096, %v1092
    %v1229 = vpack.c.b16 %v1097, %v1093
    %v1230 = vpack.c.b16 %v1098, %v1094
    %v1231 = vpack.c.b16 %v1103, %v1099
    %v1232 = vpack.c.b16 %v1104, %v1100
    %v1233 = vpack.c.b16 %v1105, %v1101
    %v1234 = vpack.c.b16 %v1106, %v1102
    %1363 = vmatprep.subr.bf16.mxu0 %v1108
    %1364 = vmatpush1.bf16.msra.mxu0 %v1107
    %1365 = vmatprep.subr.bf16.mxu0 %v1112
    %1366 = vmatpush1.bf16.msra.mxu0 %v1111
    %1367 = vmatprep.subr.bf16.mxu0 %v1116
    %1368 = vmatpush1.bf16.msra.mxu0 %v1115
    %1369 = vmatprep.subr.bf16.mxu0 %v1120
    %1370 = vmatpush1.bf16.msra.mxu0 %v1119
    %1371 = vmatprep.subr.bf16.mxu0 %v1124
    %1372 = vmatpush1.bf16.msra.mxu0 %v1123
    %1373 = vmatprep.subr.bf16.mxu0 %v1128
    %1374 = vmatpush1.bf16.msra.mxu0 %v1127
    %1375 = vmatprep.subr.bf16.mxu0 %v1132
    %1376 = vmatpush1.bf16.msra.mxu0 %v1131
    %1377 = vmatprep.subr.bf16.mxu0 %v1136
    %1378 = vmatpush1.bf16.msra.mxu0 %v1135
    %1379 = vmatprep.subr.bf16.mxu0 %v1140
    %1380 = vmatpush1.bf16.msra.mxu0 %v1139
    %1381 = vmatprep.subr.bf16.mxu0 %v1144
    %1382 = vmatpush1.bf16.msra.mxu0 %v1143
    %1383 = vmatprep.subr.bf16.mxu0 %v1148
    %1384 = vmatpush1.bf16.msra.mxu0 %v1147
    %1385 = vmatprep.subr.bf16.mxu0 %v1152
    %1386 = vmatpush1.bf16.msra.mxu0 %v1151
    %1387 = vmatprep.subr.bf16.mxu0 %v1156
    %1388 = vmatpush1.bf16.msra.mxu0 %v1155
    %1389 = vmatprep.subr.bf16.mxu0 %v1160
    %1390 = vmatpush1.bf16.msra.mxu0 %v1159
    %1391 = vmatprep.subr.bf16.mxu0 %v1164
    %1392 = vmatpush1.bf16.msra.mxu0 %v1163
    %1393 = vmatprep.subr.bf16.mxu0 %v1168
    %1394 = vmatpush1.bf16.msra.mxu0 %v1167
    %1395 = vmatprep.mubr.bf16.mxu0 %v698
    %1396 = vmatmul.mubr.bf16.gmra.mrb[0].mxu0 %v697
    %v1397 = vpop.f32.mrb[0].mxu0
    %v1398 = vadd.f32 %v706, %v1397
    %v1399 = vpop.f32.mrb[0].mxu0
    %v1400 = vadd.f32 %v710, %v1399
    %v1401 = vpop.f32.mrb[0].mxu0
    %v1402 = vadd.f32 %v706, %v1401
    %v1403 = vpop.f32.mrb[0].mxu0
    %v1404 = vadd.f32 %v710, %v1403
    %1405 = vdwg.mxu0
    %1406 = vmatprep.subr.bf16.mxu0 %v1172
    %1407 = vmatpush1.bf16.msra.mxu0 %v1171
    %1408 = vmatprep.subr.bf16.mxu0 %v1176
    %1409 = vmatpush1.bf16.msra.mxu0 %v1175
    %1410 = vmatprep.subr.bf16.mxu0 %v1180
    %1411 = vmatpush1.bf16.msra.mxu0 %v1179
    %1412 = vmatprep.subr.bf16.mxu0 %v1184
    %1413 = vmatpush1.bf16.msra.mxu0 %v1183
    %1414 = vmatprep.subr.bf16.mxu0 %v1188
    %1415 = vmatpush1.bf16.msra.mxu0 %v1187
    %1416 = vmatprep.subr.bf16.mxu0 %v1192
    %1417 = vmatpush1.bf16.msra.mxu0 %v1191
    %1418 = vmatprep.subr.bf16.mxu0 %v1196
    %1419 = vmatpush1.bf16.msra.mxu0 %v1195
    %1420 = vmatprep.subr.bf16.mxu0 %v1200
    %1421 = vmatpush1.bf16.msra.mxu0 %v1199
    %1422 = vmatprep.subr.bf16.mxu0 %v1204
    %1423 = vmatpush1.bf16.msra.mxu0 %v1203
    %1424 = vmatprep.subr.bf16.mxu0 %v1208
    %1425 = vmatpush1.bf16.msra.mxu0 %v1207
    %1426 = vmatprep.subr.bf16.mxu0 %v1212
    %1427 = vmatpush1.bf16.msra.mxu0 %v1211
    %1428 = vmatprep.subr.bf16.mxu0 %v1216
    %1429 = vmatpush1.bf16.msra.mxu0 %v1215
    %1430 = vmatprep.subr.bf16.mxu0 %v1220
    %1431 = vmatpush1.bf16.msra.mxu0 %v1219
    %1432 = vmatprep.subr.bf16.mxu0 %v1224
    %1433 = vmatpush1.bf16.msra.mxu0 %v1223
    %1434 = vmatprep.subr.bf16.mxu0 %v1228
    %1435 = vmatpush1.bf16.msra.mxu0 %v1227
    %1436 = vmatprep.subr.bf16.mxu0 %v1232
    %1437 = vmatpush1.bf16.msra.mxu0 %v1231
    %1438 = vmatprep.mubr.bf16.mxu0 %v700
    %1439 = vmatmul.mubr.bf16.gmra.mrb[0].mxu0 %v699
    %v1440 = vpop.f32.mrb[0].mxu0
    %v1441 = vadd.f32 %v1398, %v1440
    %v1442 = vpop.f32.mrb[0].mxu0
    %v1443 = vadd.f32 %v1400, %v1442
    %v1444 = vpop.f32.mrb[0].mxu0
    %v1445 = vadd.f32 %v1402, %v1444
    %v1446 = vpop.f32.mrb[0].mxu0
    %v1447 = vadd.f32 %v1404, %v1446
    %1448 = vdwg.mxu0
    %1449 = vmatprep.subr.bf16.mxu0 %v1110
    %1450 = vmatpush1.bf16.msra.mxu0 %v1109
    %1451 = vmatprep.subr.bf16.mxu0 %v1114
    %1452 = vmatpush1.bf16.msra.mxu0 %v1113
    %1453 = vmatprep.subr.bf16.mxu0 %v1118
    %1454 = vmatpush1.bf16.msra.mxu0 %v1117
    %1455 = vmatprep.subr.bf16.mxu0 %v1122
    %1456 = vmatpush1.bf16.msra.mxu0 %v1121
    %1457 = vmatprep.subr.bf16.mxu0 %v1126
    %1458 = vmatpush1.bf16.msra.mxu0 %v1125
    %1459 = vmatprep.subr.bf16.mxu0 %v1130
    %1460 = vmatpush1.bf16.msra.mxu0 %v1129
    %1461 = vmatprep.subr.bf16.mxu0 %v1134
    %1462 = vmatpush1.bf16.msra.mxu0 %v1133
    %1463 = vmatprep.subr.bf16.mxu0 %v1138
    %1464 = vmatpush1.bf16.msra.mxu0 %v1137
    %1465 = vmatprep.subr.bf16.mxu0 %v1142
    %1466 = vmatpush1.bf16.msra.mxu0 %v1141
    %1467 = vmatprep.subr.bf16.mxu0 %v1146
    %1468 = vmatpush1.bf16.msra.mxu0 %v1145
    %1469 = vmatprep.subr.bf16.mxu0 %v1150
    %1470 = vmatpush1.bf16.msra.mxu0 %v1149
    %1471 = vmatprep.subr.bf16.mxu0 %v1154
    %1472 = vmatpush1.bf16.msra.mxu0 %v1153
    %1473 = vmatprep.subr.bf16.mxu0 %v1158
    %1474 = vmatpush1.bf16.msra.mxu0 %v1157
    %1475 = vmatprep.subr.bf16.mxu0 %v1162
    %1476 = vmatpush1.bf16.msra.mxu0 %v1161
    %1477 = vmatprep.subr.bf16.mxu0 %v1166
    %1478 = vmatpush1.bf16.msra.mxu0 %v1165
    %1479 = vmatprep.subr.bf16.mxu0 %v1170
    %1480 = vmatpush1.bf16.msra.mxu0 %v1169
    %1481 = vmatprep.mubr.bf16.mxu0 %v698
    %1482 = vmatmul.mubr.bf16.gmra.mrb[0].mxu0 %v697
    %v1483 = vpop.f32.mrb[0].mxu0
    %v1484 = vadd.f32 %v714, %v1483
    %v1485 = vpop.f32.mrb[0].mxu0
    %v1486 = vadd.f32 %v718, %v1485
    %v1487 = vpop.f32.mrb[0].mxu0
    %v1488 = vadd.f32 %v714, %v1487
    %v1489 = vpop.f32.mrb[0].mxu0
    %v1490 = vadd.f32 %v718, %v1489
    %1491 = vdwg.mxu0
    %1492 = vmatprep.subr.bf16.mxu0 %v1174
    %1493 = vmatpush1.bf16.msra.mxu0 %v1173
    %1494 = vmatprep.subr.bf16.mxu0 %v1178
    %1495 = vmatpush1.bf16.msra.mxu0 %v1177
    %1496 = vmatprep.subr.bf16.mxu0 %v1182
    %1497 = vmatpush1.bf16.msra.mxu0 %v1181
    %1498 = vmatprep.subr.bf16.mxu0 %v1186
    %1499 = vmatpush1.bf16.msra.mxu0 %v1185
    %1500 = vmatprep.subr.bf16.mxu0 %v1190
    %1501 = vmatpush1.bf16.msra.mxu0 %v1189
    %1502 = vmatprep.subr.bf16.mxu0 %v1194
    %1503 = vmatpush1.bf16.msra.mxu0 %v1193
    %1504 = vmatprep.subr.bf16.mxu0 %v1198
    %1505 = vmatpush1.bf16.msra.mxu0 %v1197
    %1506 = vmatprep.subr.bf16.mxu0 %v1202
    %1507 = vmatpush1.bf16.msra.mxu0 %v1201
    %1508 = vmatprep.subr.bf16.mxu0 %v1206
    %1509 = vmatpush1.bf16.msra.mxu0 %v1205
    %1510 = vmatprep.subr.bf16.mxu0 %v1210
    %1511 = vmatpush1.bf16.msra.mxu0 %v1209
    %1512 = vmatprep.subr.bf16.mxu0 %v1214
    %1513 = vmatpush1.bf16.msra.mxu0 %v1213
    %1514 = vmatprep.subr.bf16.mxu0 %v1218
    %1515 = vmatpush1.bf16.msra.mxu0 %v1217
    %1516 = vmatprep.subr.bf16.mxu0 %v1222
    %1517 = vmatpush1.bf16.msra.mxu0 %v1221
    %1518 = vmatprep.subr.bf16.mxu0 %v1226
    %1519 = vmatpush1.bf16.msra.mxu0 %v1225
    %1520 = vmatprep.subr.bf16.mxu0 %v1230
    %1521 = vmatpush1.bf16.msra.mxu0 %v1229
    %1522 = vmatprep.subr.bf16.mxu0 %v1234
    %1523 = vmatpush1.bf16.msra.mxu0 %v1233
    %1524 = vmatprep.mubr.bf16.mxu0 %v700
    %1525 = vmatmul.mubr.bf16.gmra.mrb[0].mxu0 %v699
    %v1526 = vpop.f32.mrb[0].mxu0
    %v1527 = vadd.f32 %v1484, %v1526
    %v1528 = vpop.f32.mrb[0].mxu0
    %v1529 = vadd.f32 %v1486, %v1528
    %v1530 = vpop.f32.mrb[0].mxu0
    %v1531 = vadd.f32 %v1488, %v1530
    %v1532 = vpop.f32.mrb[0].mxu0
    %v1533 = vadd.f32 %v1490, %v1532
    %1534 = vdwg.mxu0
    %v1535 = vmax.f32 %v1441, 0.0
    %v1536 = vmax.f32 %v1443, 0.0
    %v1537 = vmax.f32 %v1527, 0.0
    %v1538 = vmax.f32 %v1529, 0.0
    %v1539 = vmax.f32 %v1445, 0.0
    %v1540 = vmax.f32 %v1447, 0.0
    %v1541 = vmax.f32 %v1531, 0.0
    %v1542 = vmax.f32 %v1533, 0.0
    %v1543 = vld [vmem:[#allocation10] sm:$0xff]
    %v1544 = vld [vmem:[#allocation10 + $0x8] sm:$0xff]
    %v1545 = vld [vmem:[#allocation10 + $0x10] sm:$0xff]
    %v1546 = vld [vmem:[#allocation10 + $0x18] sm:$0xff]
    %v1547 = vld [vmem:[#allocation10 + $0x20] sm:$0xff]
    %v1548 = vld [vmem:[#allocation10 + $0x28] sm:$0xff]
    %v1549 = vld [vmem:[#allocation10 + $0x30] sm:$0xff]
    %v1550 = vld [vmem:[#allocation10 + $0x38] sm:$0xff]
    %v1551 = vld [vmem:[#allocation10 + $0x40] sm:$0xff]
    %v1552 = vld [vmem:[#allocation10 + $0x48] sm:$0xff]
    %v1553 = vld [vmem:[#allocation10 + $0x50] sm:$0xff]
    %v1554 = vld [vmem:[#allocation10 + $0x58] sm:$0xff]
    %v1555 = vld [vmem:[#allocation10 + $0x60] sm:$0xff]
    %v1556 = vld [vmem:[#allocation10 + $0x68] sm:$0xff]
    %v1557 = vld [vmem:[#allocation10 + $0x70] sm:$0xff]
    %v1558 = vld [vmem:[#allocation10 + $0x78] sm:$0xff]
    %v1559 = vld [vmem:[#allocation10 + $0x80] sm:$0xff]
    %v1560 = vld [vmem:[#allocation10 + $0x88] sm:$0xff]
    %v1561 = vld [vmem:[#allocation10 + $0x90] sm:$0xff]
    %v1562 = vld [vmem:[#allocation10 + $0x98] sm:$0xff]
    %v1563 = vld [vmem:[#allocation10 + $0xa0] sm:$0xff]
    %v1564 = vld [vmem:[#allocation10 + $0xa8] sm:$0xff]
    %v1565 = vld [vmem:[#allocation10 + $0xb0] sm:$0xff]
    %v1566 = vld [vmem:[#allocation10 + $0xb8] sm:$0xff]
    %v1567 = vld [vmem:[#allocation10 + $0xc0] sm:$0xff]
    %v1568 = vld [vmem:[#allocation10 + $0xc8] sm:$0xff]
    %v1569 = vld [vmem:[#allocation10 + $0xd0] sm:$0xff]
    %v1570 = vld [vmem:[#allocation10 + $0xd8] sm:$0xff]
    %v1571 = vld [vmem:[#allocation10 + $0xe0] sm:$0xff]
    %v1572 = vld [vmem:[#allocation10 + $0xe8] sm:$0xff]
    %v1573 = vld [vmem:[#allocation10 + $0xf0] sm:$0xff]
    %v1574 = vld [vmem:[#allocation10 + $0xf8] sm:$0xff]
    %v1575 = vld [vmem:[#allocation10 + $0x100] sm:$0xff]
    %v1576 = vld [vmem:[#allocation10 + $0x108] sm:$0xff]
    %v1577 = vld [vmem:[#allocation10 + $0x110] sm:$0xff]
    %v1578 = vld [vmem:[#allocation10 + $0x118] sm:$0xff]
    %v1579 = vld [vmem:[#allocation10 + $0x120] sm:$0xff]
    %v1580 = vld [vmem:[#allocation10 + $0x128] sm:$0xff]
    %v1581 = vld [vmem:[#allocation10 + $0x130] sm:$0xff]
    %v1582 = vld [vmem:[#allocation10 + $0x138] sm:$0xff]
    %v1583 = vld [vmem:[#allocation10 + $0x140] sm:$0xff]
    %v1584 = vld [vmem:[#allocation10 + $0x148] sm:$0xff]
    %v1585 = vld [vmem:[#allocation10 + $0x150] sm:$0xff]
    %v1586 = vld [vmem:[#allocation10 + $0x158] sm:$0xff]
    %v1587 = vld [vmem:[#allocation10 + $0x160] sm:$0xff]
    %v1588 = vld [vmem:[#allocation10 + $0x168] sm:$0xff]
    %v1589 = vld [vmem:[#allocation10 + $0x170] sm:$0xff]
    %v1590 = vld [vmem:[#allocation10 + $0x178] sm:$0xff]
    %v1591 = vld [vmem:[#allocation10 + $0x180] sm:$0xff]
    %v1592 = vld [vmem:[#allocation10 + $0x188] sm:$0xff]
    %v1593 = vld [vmem:[#allocation10 + $0x190] sm:$0xff]
    %v1594 = vld [vmem:[#allocation10 + $0x198] sm:$0xff]
    %v1595 = vld [vmem:[#allocation10 + $0x1a0] sm:$0xff]
    %v1596 = vld [vmem:[#allocation10 + $0x1a8] sm:$0xff]
    %v1597 = vld [vmem:[#allocation10 + $0x1b0] sm:$0xff]
    %v1598 = vld [vmem:[#allocation10 + $0x1b8] sm:$0xff]
    %v1599 = vld [vmem:[#allocation10 + $0x1c0] sm:$0xff]
    %v1600 = vld [vmem:[#allocation10 + $0x1c8] sm:$0xff]
    %v1601 = vld [vmem:[#allocation10 + $0x1d0] sm:$0xff]
    %v1602 = vld [vmem:[#allocation10 + $0x1d8] sm:$0xff]
    %v1603 = vld [vmem:[#allocation10 + $0x1e0] sm:$0xff]
    %v1604 = vld [vmem:[#allocation10 + $0x1e8] sm:$0xff]
    %v1605 = vld [vmem:[#allocation10 + $0x1f0] sm:$0xff]
    %v1606 = vld [vmem:[#allocation10 + $0x1f8] sm:$0xff]
    %v1607 = vld [vmem:[#allocation10 + $0x200] sm:$0xff]
    %v1608 = vld [vmem:[#allocation10 + $0x208] sm:$0xff]
    %v1609 = vld [vmem:[#allocation10 + $0x210] sm:$0xff]
    %v1610 = vld [vmem:[#allocation10 + $0x218] sm:$0xff]
    %v1611 = vld [vmem:[#allocation10 + $0x220] sm:$0xff]
    %v1612 = vld [vmem:[#allocation10 + $0x228] sm:$0xff]
    %v1613 = vld [vmem:[#allocation10 + $0x230] sm:$0xff]
    %v1614 = vld [vmem:[#allocation10 + $0x238] sm:$0xff]
    %v1615 = vld [vmem:[#allocation10 + $0x240] sm:$0xff]
    %v1616 = vld [vmem:[#allocation10 + $0x248] sm:$0xff]
    %v1617 = vld [vmem:[#allocation10 + $0x250] sm:$0xff]
    %v1618 = vld [vmem:[#allocation10 + $0x258] sm:$0xff]
    %v1619 = vld [vmem:[#allocation10 + $0x260] sm:$0xff]
    %v1620 = vld [vmem:[#allocation10 + $0x268] sm:$0xff]
    %v1621 = vld [vmem:[#allocation10 + $0x270] sm:$0xff]
    %v1622 = vld [vmem:[#allocation10 + $0x278] sm:$0xff]
    %v1623 = vld [vmem:[#allocation10 + $0x280] sm:$0xff]
    %v1624 = vld [vmem:[#allocation10 + $0x288] sm:$0xff]
    %v1625 = vld [vmem:[#allocation10 + $0x290] sm:$0xff]
    %v1626 = vld [vmem:[#allocation10 + $0x298] sm:$0xff]
    %v1627 = vld [vmem:[#allocation10 + $0x2a0] sm:$0xff]
    %v1628 = vld [vmem:[#allocation10 + $0x2a8] sm:$0xff]
    %v1629 = vld [vmem:[#allocation10 + $0x2b0] sm:$0xff]
    %v1630 = vld [vmem:[#allocation10 + $0x2b8] sm:$0xff]
    %v1631 = vld [vmem:[#allocation10 + $0x2c0] sm:$0xff]
    %v1632 = vld [vmem:[#allocation10 + $0x2c8] sm:$0xff]
    %v1633 = vld [vmem:[#allocation10 + $0x2d0] sm:$0xff]
    %v1634 = vld [vmem:[#allocation10 + $0x2d8] sm:$0xff]
    %v1635 = vld [vmem:[#allocation10 + $0x2e0] sm:$0xff]
    %v1636 = vld [vmem:[#allocation10 + $0x2e8] sm:$0xff]
    %v1637 = vld [vmem:[#allocation10 + $0x2f0] sm:$0xff]
    %v1638 = vld [vmem:[#allocation10 + $0x2f8] sm:$0xff]
    %v1639 = vld [vmem:[#allocation10 + $0x300] sm:$0xff]
    %v1640 = vld [vmem:[#allocation10 + $0x308] sm:$0xff]
    %v1641 = vld [vmem:[#allocation10 + $0x310] sm:$0xff]
    %v1642 = vld [vmem:[#allocation10 + $0x318] sm:$0xff]
    %v1643 = vld [vmem:[#allocation10 + $0x320] sm:$0xff]
    %v1644 = vld [vmem:[#allocation10 + $0x328] sm:$0xff]
    %v1645 = vld [vmem:[#allocation10 + $0x330] sm:$0xff]
    %v1646 = vld [vmem:[#allocation10 + $0x338] sm:$0xff]
    %v1647 = vld [vmem:[#allocation10 + $0x340] sm:$0xff]
    %v1648 = vld [vmem:[#allocation10 + $0x348] sm:$0xff]
    %v1649 = vld [vmem:[#allocation10 + $0x350] sm:$0xff]
    %v1650 = vld [vmem:[#allocation10 + $0x358] sm:$0xff]
    %v1651 = vld [vmem:[#allocation10 + $0x360] sm:$0xff]
    %v1652 = vld [vmem:[#allocation10 + $0x368] sm:$0xff]
    %v1653 = vld [vmem:[#allocation10 + $0x370] sm:$0xff]
    %v1654 = vld [vmem:[#allocation10 + $0x378] sm:$0xff]
    %v1655 = vld [vmem:[#allocation10 + $0x380] sm:$0xff]
    %v1656 = vld [vmem:[#allocation10 + $0x388] sm:$0xff]
    %v1657 = vld [vmem:[#allocation10 + $0x390] sm:$0xff]
    %v1658 = vld [vmem:[#allocation10 + $0x398] sm:$0xff]
    %v1659 = vld [vmem:[#allocation10 + $0x3a0] sm:$0xff]
    %v1660 = vld [vmem:[#allocation10 + $0x3a8] sm:$0xff]
    %v1661 = vld [vmem:[#allocation10 + $0x3b0] sm:$0xff]
    %v1662 = vld [vmem:[#allocation10 + $0x3b8] sm:$0xff]
    %v1663 = vld [vmem:[#allocation10 + $0x3c0] sm:$0xff]
    %v1664 = vld [vmem:[#allocation10 + $0x3c8] sm:$0xff]
    %v1665 = vld [vmem:[#allocation10 + $0x3d0] sm:$0xff]
    %v1666 = vld [vmem:[#allocation10 + $0x3d8] sm:$0xff]
    %v1667 = vld [vmem:[#allocation10 + $0x3e0] sm:$0xff]
    %v1668 = vld [vmem:[#allocation10 + $0x3e8] sm:$0xff]
    %v1669 = vld [vmem:[#allocation10 + $0x3f0] sm:$0xff]
    %v1670 = vld [vmem:[#allocation10 + $0x3f8] sm:$0xff]
    %v1671 = vpack.c.bf16 %v1539, %v1535
    %v1672 = vpack.c.bf16 %v1540, %v1536
    %v1673 = vpack.c.bf16 %v1541, %v1537
    %v1674 = vpack.c.bf16 %v1542, %v1538
    %1675 = vmatprep.subr.bf16.mxu0 %v1672
    %1676 = vmatpush1.bf16.msra.mxu0 %v1671
    %1677 = vmatprep.subr.bf16.mxu0 0
    %1678 = vmatpush1.bf16.msra.mxu0 0
    %1679 = vmatprep.subr.bf16.mxu0 0
    %1680 = vmatpush1.bf16.msra.mxu0 0
    %1681 = vmatprep.subr.bf16.mxu0 0
    %1682 = vmatpush1.bf16.msra.mxu0 0
    %1683 = vmatprep.subr.bf16.mxu0 0
    %1684 = vmatpush1.bf16.msra.mxu0 0
    %1685 = vmatprep.subr.bf16.mxu0 0
    %1686 = vmatpush1.bf16.msra.mxu0 0
    %1687 = vmatprep.subr.bf16.mxu0 0
    %1688 = vmatpush1.bf16.msra.mxu0 0
    %1689 = vmatprep.subr.bf16.mxu0 0
    %1690 = vmatpush1.bf16.msra.mxu0 0
    %1691 = vmatprep.subr.bf16.mxu0 0
    %1692 = vmatpush1.bf16.msra.mxu0 0
    %1693 = vmatprep.subr.bf16.mxu0 0
    %1694 = vmatpush1.bf16.msra.mxu0 0
    %1695 = vmatprep.subr.bf16.mxu0 0
    %1696 = vmatpush1.bf16.msra.mxu0 0
    %1697 = vmatprep.subr.bf16.mxu0 0
    %1698 = vmatpush1.bf16.msra.mxu0 0
    %1699 = vmatprep.subr.bf16.mxu0 0
    %1700 = vmatpush1.bf16.msra.mxu0 0
    %1701 = vmatprep.subr.bf16.mxu0 0
    %1702 = vmatpush1.bf16.msra.mxu0 0
    %1703 = vmatprep.subr.bf16.mxu0 0
    %1704 = vmatpush1.bf16.msra.mxu0 0
    %1705 = vmatprep.subr.bf16.mxu0 0
    %1706 = vmatpush1.bf16.msra.mxu0 0
    %1707 = vmatprep.mubr.bf16.mxu0 0
    %1708 = vmatmul.mubr.bf16.gmra.mrb[0].mxu0 %v159
    %v1709 = vpop.f32.mrb[0].mxu0
    %v1710 = vadd.f32 0.0, %v1709
    %v1711 = vpop.f32.mrb[0].mxu0
    %v1712 = vadd.f32 0.0, %v1711
    %v1713 = vpop.f32.mrb[0].mxu0
    %v1714 = vadd.f32 0.0, %v1713
    %v1715 = vpop.f32.mrb[0].mxu0
    %v1716 = vadd.f32 0.0, %v1715
    %1717 = vdwg.mxu0
    %1718 = vmatprep.subr.bf16.mxu0 %v1674
    %1719 = vmatpush1.bf16.msra.mxu0 %v1673
    %1720 = vmatprep.subr.bf16.mxu0 0
    %1721 = vmatpush1.bf16.msra.mxu0 0
    %1722 = vmatprep.subr.bf16.mxu0 0
    %1723 = vmatpush1.bf16.msra.mxu0 0
    %1724 = vmatprep.subr.bf16.mxu0 0
    %1725 = vmatpush1.bf16.msra.mxu0 0
    %1726 = vmatprep.subr.bf16.mxu0 0
    %1727 = vmatpush1.bf16.msra.mxu0 0
    %1728 = vmatprep.subr.bf16.mxu0 0
    %1729 = vmatpush1.bf16.msra.mxu0 0
    %1730 = vmatprep.subr.bf16.mxu0 0
    %1731 = vmatpush1.bf16.msra.mxu0 0
    %1732 = vmatprep.subr.bf16.mxu0 0
    %1733 = vmatpush1.bf16.msra.mxu0 0
    %1734 = vmatprep.subr.bf16.mxu0 0
    %1735 = vmatpush1.bf16.msra.mxu0 0
    %1736 = vmatprep.subr.bf16.mxu0 0
    %1737 = vmatpush1.bf16.msra.mxu0 0
    %1738 = vmatprep.subr.bf16.mxu0 0
    %1739 = vmatpush1.bf16.msra.mxu0 0
    %1740 = vmatprep.subr.bf16.mxu0 0
    %1741 = vmatpush1.bf16.msra.mxu0 0
    %1742 = vmatprep.subr.bf16.mxu0 0
    %1743 = vmatpush1.bf16.msra.mxu0 0
    %1744 = vmatprep.subr.bf16.mxu0 0
    %1745 = vmatpush1.bf16.msra.mxu0 0
    %1746 = vmatprep.subr.bf16.mxu0 0
    %1747 = vmatpush1.bf16.msra.mxu0 0
    %1748 = vmatprep.subr.bf16.mxu0 0
    %1749 = vmatpush1.bf16.msra.mxu0 0
    %1750 = vmatprep.mubr.bf16.mxu0 0
    %1751 = vmatmul.mubr.bf16.gmra.mrb[0].mxu0 %v159
    %v1752 = vpop.f32.mrb[0].mxu0
    %v1753 = vadd.f32 0.0, %v1752
    %v1754 = vpop.f32.mrb[0].mxu0
    %v1755 = vadd.f32 0.0, %v1754
    %v1756 = vpop.f32.mrb[0].mxu0
    %v1757 = vadd.f32 0.0, %v1756
    %v1758 = vpop.f32.mrb[0].mxu0
    %v1759 = vadd.f32 0.0, %v1758
    %1760 = vdwg.mxu0
    %v1761 = vpack.c.bf16 %v1714, %v1710
    %v1762 = vpack.c.bf16 %v1716, %v1712
    %v1763 = vpack.c.bf16 %v1757, %v1753
    %v1764 = vpack.c.bf16 %v1759, %v1755
    %v1765 = vld [vmem:[%s7] sm:$0xf]
    %v1767 = vlaneseq
    %v1768 = vshrl.u32 %v1767, 7
    %v1769 = vsub.s32 0, %v1768
    %v1770 = vrot.slane %v1765, %v1769
    %v1771 = vlaneseq
    %v1772 = vshrl.u32 %v1771, 7
    %v1773 = vsub.s32 1, %v1772
    %v1774 = vrot.slane %v1765, %v1773
    %v1775 = vlaneseq
    %v1776 = vshrl.u32 %v1775, 7
    %v1777 = vsub.s32 2, %v1776
    %v1778 = vrot.slane %v1765, %v1777
    %v1779 = vlaneseq
    %v1780 = vshrl.u32 %v1779, 7
    %v1781 = vsub.s32 3, %v1780
    %v1782 = vrot.slane %v1765, %v1781
    %v1915 = vunpack.c.l.b16 %v1543
    %v1916 = vunpack.c.h.b16 %v1543
    %v1917 = vunpack.c.l.b16 %v1544
    %v1918 = vunpack.c.h.b16 %v1544
    %v1919 = vunpack.c.l.b16 %v1545
    %v1920 = vunpack.c.h.b16 %v1545
    %v1921 = vunpack.c.l.b16 %v1546
    %v1922 = vunpack.c.h.b16 %v1546
    %v1923 = vunpack.c.l.b16 %v1547
    %v1924 = vunpack.c.h.b16 %v1547
    %v1925 = vunpack.c.l.b16 %v1548
    %v1926 = vunpack.c.h.b16 %v1548
    %v1927 = vunpack.c.l.b16 %v1549
    %v1928 = vunpack.c.h.b16 %v1549
    %v1929 = vunpack.c.l.b16 %v1550
    %v1930 = vunpack.c.h.b16 %v1550
    %v1931 = vunpack.c.l.b16 %v1551
    %v1932 = vunpack.c.h.b16 %v1551
    %v1933 = vunpack.c.l.b16 %v1552
    %v1934 = vunpack.c.h.b16 %v1552
    %v1935 = vunpack.c.l.b16 %v1553
    %v1936 = vunpack.c.h.b16 %v1553
    %v1937 = vunpack.c.l.b16 %v1554
    %v1938 = vunpack.c.h.b16 %v1554
    %v1939 = vunpack.c.l.b16 %v1555
    %v1940 = vunpack.c.h.b16 %v1555
    %v1941 = vunpack.c.l.b16 %v1556
    %v1942 = vunpack.c.h.b16 %v1556
    %v1943 = vunpack.c.l.b16 %v1557
    %v1944 = vunpack.c.h.b16 %v1557
    %v1945 = vunpack.c.l.b16 %v1558
    %v1946 = vunpack.c.h.b16 %v1558
    %v1947 = vunpack.c.l.b16 %v1559
    %v1948 = vunpack.c.h.b16 %v1559
    %v1949 = vunpack.c.l.b16 %v1560
    %v1950 = vunpack.c.h.b16 %v1560
    %v1951 = vunpack.c.l.b16 %v1561
    %v1952 = vunpack.c.h.b16 %v1561
    %v1953 = vunpack.c.l.b16 %v1562
    %v1954 = vunpack.c.h.b16 %v1562
    %v1955 = vunpack.c.l.b16 %v1563
    %v1956 = vunpack.c.h.b16 %v1563
    %v1957 = vunpack.c.l.b16 %v1564
    %v1958 = vunpack.c.h.b16 %v1564
    %v1959 = vunpack.c.l.b16 %v1565
    %v1960 = vunpack.c.h.b16 %v1565
    %v1961 = vunpack.c.l.b16 %v1566
    %v1962 = vunpack.c.h.b16 %v1566
    %v1963 = vunpack.c.l.b16 %v1567
    %v1964 = vunpack.c.h.b16 %v1567
    %v1965 = vunpack.c.l.b16 %v1568
    %v1966 = vunpack.c.h.b16 %v1568
    %v1967 = vunpack.c.l.b16 %v1569
    %v1968 = vunpack.c.h.b16 %v1569
    %v1969 = vunpack.c.l.b16 %v1570
    %v1970 = vunpack.c.h.b16 %v1570
    %v1971 = vunpack.c.l.b16 %v1571
    %v1972 = vunpack.c.h.b16 %v1571
    %v1973 = vunpack.c.l.b16 %v1572
    %v1974 = vunpack.c.h.b16 %v1572
    %v1975 = vunpack.c.l.b16 %v1573
    %v1976 = vunpack.c.h.b16 %v1573
    %v1977 = vunpack.c.l.b16 %v1574
    %v1978 = vunpack.c.h.b16 %v1574
    %v1979 = vunpack.c.l.b16 %v1575
    %v1980 = vunpack.c.h.b16 %v1575
    %v1981 = vunpack.c.l.b16 %v1576
    %v1982 = vunpack.c.h.b16 %v1576
    %v1983 = vunpack.c.l.b16 %v1577
    %v1984 = vunpack.c.h.b16 %v1577
    %v1985 = vunpack.c.l.b16 %v1578
    %v1986 = vunpack.c.h.b16 %v1578
    %v1987 = vunpack.c.l.b16 %v1579
    %v1988 = vunpack.c.h.b16 %v1579
    %v1989 = vunpack.c.l.b16 %v1580
    %v1990 = vunpack.c.h.b16 %v1580
    %v1991 = vunpack.c.l.b16 %v1581
    %v1992 = vunpack.c.h.b16 %v1581
    %v1993 = vunpack.c.l.b16 %v1582
    %v1994 = vunpack.c.h.b16 %v1582
    %v1995 = vunpack.c.l.b16 %v1583
    %v1996 = vunpack.c.h.b16 %v1583
    %v1997 = vunpack.c.l.b16 %v1584
    %v1998 = vunpack.c.h.b16 %v1584
    %v1999 = vunpack.c.l.b16 %v1585
    %v2000 = vunpack.c.h.b16 %v1585
    %v2001 = vunpack.c.l.b16 %v1586
    %v2002 = vunpack.c.h.b16 %v1586
    %v2003 = vunpack.c.l.b16 %v1587
    %v2004 = vunpack.c.h.b16 %v1587
    %v2005 = vunpack.c.l.b16 %v1588
    %v2006 = vunpack.c.h.b16 %v1588
    %v2007 = vunpack.c.l.b16 %v1589
    %v2008 = vunpack.c.h.b16 %v1589
    %v2009 = vunpack.c.l.b16 %v1590
    %v2010 = vunpack.c.h.b16 %v1590
    %v2011 = vunpack.c.l.b16 %v1591
    %v2012 = vunpack.c.h.b16 %v1591
    %v2013 = vunpack.c.l.b16 %v1592
    %v2014 = vunpack.c.h.b16 %v1592
    %v2015 = vunpack.c.l.b16 %v1593
    %v2016 = vunpack.c.h.b16 %v1593
    %v2017 = vunpack.c.l.b16 %v1594
    %v2018 = vunpack.c.h.b16 %v1594
    %v2019 = vunpack.c.l.b16 %v1595
    %v2020 = vunpack.c.h.b16 %v1595
    %v2021 = vunpack.c.l.b16 %v1596
    %v2022 = vunpack.c.h.b16 %v1596
    %v2023 = vunpack.c.l.b16 %v1597
    %v2024 = vunpack.c.h.b16 %v1597
    %v2025 = vunpack.c.l.b16 %v1598
    %v2026 = vunpack.c.h.b16 %v1598
    %v2027 = vunpack.c.l.b16 %v1599
    %v2028 = vunpack.c.h.b16 %v1599
    %v2029 = vunpack.c.l.b16 %v1600
    %v2030 = vunpack.c.h.b16 %v1600
    %v2031 = vunpack.c.l.b16 %v1601
    %v2032 = vunpack.c.h.b16 %v1601
    %v2033 = vunpack.c.l.b16 %v1602
    %v2034 = vunpack.c.h.b16 %v1602
    %v2035 = vunpack.c.l.b16 %v1603
    %v2036 = vunpack.c.h.b16 %v1603
    %v2037 = vunpack.c.l.b16 %v1604
    %v2038 = vunpack.c.h.b16 %v1604
    %v2039 = vunpack.c.l.b16 %v1605
    %v2040 = vunpack.c.h.b16 %v1605
    %v2041 = vunpack.c.l.b16 %v1606
    %v2042 = vunpack.c.h.b16 %v1606
    %v2043 = vunpack.c.l.b16 %v1607
    %v2044 = vunpack.c.h.b16 %v1607
    %v2045 = vunpack.c.l.b16 %v1608
    %v2046 = vunpack.c.h.b16 %v1608
    %v2047 = vunpack.c.l.b16 %v1609
    %v2048 = vunpack.c.h.b16 %v1609
    %v2049 = vunpack.c.l.b16 %v1610
    %v2050 = vunpack.c.h.b16 %v1610
    %v2051 = vunpack.c.l.b16 %v1611
    %v2052 = vunpack.c.h.b16 %v1611
    %v2053 = vunpack.c.l.b16 %v1612
    %v2054 = vunpack.c.h.b16 %v1612
    %v2055 = vunpack.c.l.b16 %v1613
    %v2056 = vunpack.c.h.b16 %v1613
    %v2057 = vunpack.c.l.b16 %v1614
    %v2058 = vunpack.c.h.b16 %v1614
    %v2059 = vunpack.c.l.b16 %v1615
    %v2060 = vunpack.c.h.b16 %v1615
    %v2061 = vunpack.c.l.b16 %v1616
    %v2062 = vunpack.c.h.b16 %v1616
    %v2063 = vunpack.c.l.b16 %v1617
    %v2064 = vunpack.c.h.b16 %v1617
    %v2065 = vunpack.c.l.b16 %v1618
    %v2066 = vunpack.c.h.b16 %v1618
    %v2067 = vunpack.c.l.b16 %v1619
    %v2068 = vunpack.c.h.b16 %v1619
    %v2069 = vunpack.c.l.b16 %v1620
    %v2070 = vunpack.c.h.b16 %v1620
    %v2071 = vunpack.c.l.b16 %v1621
    %v2072 = vunpack.c.h.b16 %v1621
    %v2073 = vunpack.c.l.b16 %v1622
    %v2074 = vunpack.c.h.b16 %v1622
    %v2075 = vunpack.c.l.b16 %v1623
    %v2076 = vunpack.c.h.b16 %v1623
    %v2077 = vunpack.c.l.b16 %v1624
    %v2078 = vunpack.c.h.b16 %v1624
    %v2079 = vunpack.c.l.b16 %v1625
    %v2080 = vunpack.c.h.b16 %v1625
    %v2081 = vunpack.c.l.b16 %v1626
    %v2082 = vunpack.c.h.b16 %v1626
    %v2083 = vunpack.c.l.b16 %v1627
    %v2084 = vunpack.c.h.b16 %v1627
    %v2085 = vunpack.c.l.b16 %v1628
    %v2086 = vunpack.c.h.b16 %v1628
    %v2087 = vunpack.c.l.b16 %v1629
    %v2088 = vunpack.c.h.b16 %v1629
    %v2089 = vunpack.c.l.b16 %v1630
    %v2090 = vunpack.c.h.b16 %v1630
    %v2091 = vunpack.c.l.b16 %v1631
    %v2092 = vunpack.c.h.b16 %v1631
    %v2093 = vunpack.c.l.b16 %v1632
    %v2094 = vunpack.c.h.b16 %v1632
    %v2095 = vunpack.c.l.b16 %v1633
    %v2096 = vunpack.c.h.b16 %v1633
    %v2097 = vunpack.c.l.b16 %v1634
    %v2098 = vunpack.c.h.b16 %v1634
    %v2099 = vunpack.c.l.b16 %v1635
    %v2100 = vunpack.c.h.b16 %v1635
    %v2101 = vunpack.c.l.b16 %v1636
    %v2102 = vunpack.c.h.b16 %v1636
    %v2103 = vunpack.c.l.b16 %v1637
    %v2104 = vunpack.c.h.b16 %v1637
    %v2105 = vunpack.c.l.b16 %v1638
    %v2106 = vunpack.c.h.b16 %v1638
    %v2107 = vunpack.c.l.b16 %v1639
    %v2108 = vunpack.c.h.b16 %v1639
    %v2109 = vunpack.c.l.b16 %v1640
    %v2110 = vunpack.c.h.b16 %v1640
    %v2111 = vunpack.c.l.b16 %v1641
    %v2112 = vunpack.c.h.b16 %v1641
    %v2113 = vunpack.c.l.b16 %v1642
    %v2114 = vunpack.c.h.b16 %v1642
    %v2115 = vunpack.c.l.b16 %v1643
    %v2116 = vunpack.c.h.b16 %v1643
    %v2117 = vunpack.c.l.b16 %v1644
    %v2118 = vunpack.c.h.b16 %v1644
    %v2119 = vunpack.c.l.b16 %v1645
    %v2120 = vunpack.c.h.b16 %v1645
    %v2121 = vunpack.c.l.b16 %v1646
    %v2122 = vunpack.c.h.b16 %v1646
    %v2123 = vunpack.c.l.b16 %v1647
    %v2124 = vunpack.c.h.b16 %v1647
    %v2125 = vunpack.c.l.b16 %v1648
    %v2126 = vunpack.c.h.b16 %v1648
    %v2127 = vunpack.c.l.b16 %v1649
    %v2128 = vunpack.c.h.b16 %v1649
    %v2129 = vunpack.c.l.b16 %v1650
    %v2130 = vunpack.c.h.b16 %v1650
    %v2131 = vunpack.c.l.b16 %v1651
    %v2132 = vunpack.c.h.b16 %v1651
    %v2133 = vunpack.c.l.b16 %v1652
    %v2134 = vunpack.c.h.b16 %v1652
    %v2135 = vunpack.c.l.b16 %v1653
    %v2136 = vunpack.c.h.b16 %v1653
    %v2137 = vunpack.c.l.b16 %v1654
    %v2138 = vunpack.c.h.b16 %v1654
    %v2139 = vunpack.c.l.b16 %v1655
    %v2140 = vunpack.c.h.b16 %v1655
    %v2141 = vunpack.c.l.b16 %v1656
    %v2142 = vunpack.c.h.b16 %v1656
    %v2143 = vunpack.c.l.b16 %v1657
    %v2144 = vunpack.c.h.b16 %v1657
    %v2145 = vunpack.c.l.b16 %v1658
    %v2146 = vunpack.c.h.b16 %v1658
    %v2147 = vunpack.c.l.b16 %v1659
    %v2148 = vunpack.c.h.b16 %v1659
    %v2149 = vunpack.c.l.b16 %v1660
    %v2150 = vunpack.c.h.b16 %v1660
    %v2151 = vunpack.c.l.b16 %v1661
    %v2152 = vunpack.c.h.b16 %v1661
    %v2153 = vunpack.c.l.b16 %v1662
    %v2154 = vunpack.c.h.b16 %v1662
    %v2155 = vunpack.c.l.b16 %v1663
    %v2156 = vunpack.c.h.b16 %v1663
    %v2157 = vunpack.c.l.b16 %v1664
    %v2158 = vunpack.c.h.b16 %v1664
    %v2159 = vunpack.c.l.b16 %v1665
    %v2160 = vunpack.c.h.b16 %v1665
    %v2161 = vunpack.c.l.b16 %v1666
    %v2162 = vunpack.c.h.b16 %v1666
    %v2163 = vunpack.c.l.b16 %v1667
    %v2164 = vunpack.c.h.b16 %v1667
    %v2165 = vunpack.c.l.b16 %v1668
    %v2166 = vunpack.c.h.b16 %v1668
    %v2167 = vunpack.c.l.b16 %v1669
    %v2168 = vunpack.c.h.b16 %v1669
    %v2169 = vunpack.c.l.b16 %v1670
    %v2170 = vunpack.c.h.b16 %v1670
    %v2171 = vpack.c.b16 %v1919, %v1915
    %v2172 = vpack.c.b16 %v1920, %v1916
    %v2173 = vpack.c.b16 %v1921, %v1917
    %v2174 = vpack.c.b16 %v1922, %v1918
    %v2175 = vpack.c.b16 %v1927, %v1923
    %v2176 = vpack.c.b16 %v1928, %v1924
    %v2177 = vpack.c.b16 %v1929, %v1925
    %v2178 = vpack.c.b16 %v1930, %v1926
    %v2179 = vpack.c.b16 %v1935, %v1931
    %v2180 = vpack.c.b16 %v1936, %v1932
    %v2181 = vpack.c.b16 %v1937, %v1933
    %v2182 = vpack.c.b16 %v1938, %v1934
    %v2183 = vpack.c.b16 %v1943, %v1939
    %v2184 = vpack.c.b16 %v1944, %v1940
    %v2185 = vpack.c.b16 %v1945, %v1941
    %v2186 = vpack.c.b16 %v1946, %v1942
    %v2187 = vpack.c.b16 %v1951, %v1947
    %v2188 = vpack.c.b16 %v1952, %v1948
    %v2189 = vpack.c.b16 %v1953, %v1949
    %v2190 = vpack.c.b16 %v1954, %v1950
    %v2191 = vpack.c.b16 %v1959, %v1955
    %v2192 = vpack.c.b16 %v1960, %v1956
    %v2193 = vpack.c.b16 %v1961, %v1957
    %v2194 = vpack.c.b16 %v1962, %v1958
    %v2195 = vpack.c.b16 %v1967, %v1963
    %v2196 = vpack.c.b16 %v1968, %v1964
    %v2197 = vpack.c.b16 %v1969, %v1965
    %v2198 = vpack.c.b16 %v1970, %v1966
    %v2199 = vpack.c.b16 %v1975, %v1971
    %v2200 = vpack.c.b16 %v1976, %v1972
    %v2201 = vpack.c.b16 %v1977, %v1973
    %v2202 = vpack.c.b16 %v1978, %v1974
    %v2203 = vpack.c.b16 %v1983, %v1979
    %v2204 = vpack.c.b16 %v1984, %v1980
    %v2205 = vpack.c.b16 %v1985, %v1981
    %v2206 = vpack.c.b16 %v1986, %v1982
    %v2207 = vpack.c.b16 %v1991, %v1987
    %v2208 = vpack.c.b16 %v1992, %v1988
    %v2209 = vpack.c.b16 %v1993, %v1989
    %v2210 = vpack.c.b16 %v1994, %v1990
    %v2211 = vpack.c.b16 %v1999, %v1995
    %v2212 = vpack.c.b16 %v2000, %v1996
    %v2213 = vpack.c.b16 %v2001, %v1997
    %v2214 = vpack.c.b16 %v2002, %v1998
    %v2215 = vpack.c.b16 %v2007, %v2003
    %v2216 = vpack.c.b16 %v2008, %v2004
    %v2217 = vpack.c.b16 %v2009, %v2005
    %v2218 = vpack.c.b16 %v2010, %v2006
    %v2219 = vpack.c.b16 %v2015, %v2011
    %v2220 = vpack.c.b16 %v2016, %v2012
    %v2221 = vpack.c.b16 %v2017, %v2013
    %v2222 = vpack.c.b16 %v2018, %v2014
    %v2223 = vpack.c.b16 %v2023, %v2019
    %v2224 = vpack.c.b16 %v2024, %v2020
    %v2225 = vpack.c.b16 %v2025, %v2021
    %v2226 = vpack.c.b16 %v2026, %v2022
    %v2227 = vpack.c.b16 %v2031, %v2027
    %v2228 = vpack.c.b16 %v2032, %v2028
    %v2229 = vpack.c.b16 %v2033, %v2029
    %v2230 = vpack.c.b16 %v2034, %v2030
    %v2231 = vpack.c.b16 %v2039, %v2035
    %v2232 = vpack.c.b16 %v2040, %v2036
    %v2233 = vpack.c.b16 %v2041, %v2037
    %v2234 = vpack.c.b16 %v2042, %v2038
    %v2235 = vpack.c.b16 %v2047, %v2043
    %v2236 = vpack.c.b16 %v2048, %v2044
    %v2237 = vpack.c.b16 %v2049, %v2045
    %v2238 = vpack.c.b16 %v2050, %v2046
    %v2239 = vpack.c.b16 %v2055, %v2051
    %v2240 = vpack.c.b16 %v2056, %v2052
    %v2241 = vpack.c.b16 %v2057, %v2053
    %v2242 = vpack.c.b16 %v2058, %v2054
    %v2243 = vpack.c.b16 %v2063, %v2059
    %v2244 = vpack.c.b16 %v2064, %v2060
    %v2245 = vpack.c.b16 %v2065, %v2061
    %v2246 = vpack.c.b16 %v2066, %v2062
    %v2247 = vpack.c.b16 %v2071, %v2067
    %v2248 = vpack.c.b16 %v2072, %v2068
    %v2249 = vpack.c.b16 %v2073, %v2069
    %v2250 = vpack.c.b16 %v2074, %v2070
    %v2251 = vpack.c.b16 %v2079, %v2075
    %v2252 = vpack.c.b16 %v2080, %v2076
    %v2253 = vpack.c.b16 %v2081, %v2077
    %v2254 = vpack.c.b16 %v2082, %v2078
    %v2255 = vpack.c.b16 %v2087, %v2083
    %v2256 = vpack.c.b16 %v2088, %v2084
    %v2257 = vpack.c.b16 %v2089, %v2085
    %v2258 = vpack.c.b16 %v2090, %v2086
    %v2259 = vpack.c.b16 %v2095, %v2091
    %v2260 = vpack.c.b16 %v2096, %v2092
    %v2261 = vpack.c.b16 %v2097, %v2093
    %v2262 = vpack.c.b16 %v2098, %v2094
    %v2263 = vpack.c.b16 %v2103, %v2099
    %v2264 = vpack.c.b16 %v2104, %v2100
    %v2265 = vpack.c.b16 %v2105, %v2101
    %v2266 = vpack.c.b16 %v2106, %v2102
    %v2267 = vpack.c.b16 %v2111, %v2107
    %v2268 = vpack.c.b16 %v2112, %v2108
    %v2269 = vpack.c.b16 %v2113, %v2109
    %v2270 = vpack.c.b16 %v2114, %v2110
    %v2271 = vpack.c.b16 %v2119, %v2115
    %v2272 = vpack.c.b16 %v2120, %v2116
    %v2273 = vpack.c.b16 %v2121, %v2117
    %v2274 = vpack.c.b16 %v2122, %v2118
    %v2275 = vpack.c.b16 %v2127, %v2123
    %v2276 = vpack.c.b16 %v2128, %v2124
    %v2277 = vpack.c.b16 %v2129, %v2125
    %v2278 = vpack.c.b16 %v2130, %v2126
    %v2279 = vpack.c.b16 %v2135, %v2131
    %v2280 = vpack.c.b16 %v2136, %v2132
    %v2281 = vpack.c.b16 %v2137, %v2133
    %v2282 = vpack.c.b16 %v2138, %v2134
    %v2283 = vpack.c.b16 %v2143, %v2139
    %v2284 = vpack.c.b16 %v2144, %v2140
    %v2285 = vpack.c.b16 %v2145, %v2141
    %v2286 = vpack.c.b16 %v2146, %v2142
    %v2287 = vpack.c.b16 %v2151, %v2147
    %v2288 = vpack.c.b16 %v2152, %v2148
    %v2289 = vpack.c.b16 %v2153, %v2149
    %v2290 = vpack.c.b16 %v2154, %v2150
    %v2291 = vpack.c.b16 %v2159, %v2155
    %v2292 = vpack.c.b16 %v2160, %v2156
    %v2293 = vpack.c.b16 %v2161, %v2157
    %v2294 = vpack.c.b16 %v2162, %v2158
    %v2295 = vpack.c.b16 %v2167, %v2163
    %v2296 = vpack.c.b16 %v2168, %v2164
    %v2297 = vpack.c.b16 %v2169, %v2165
    %v2298 = vpack.c.b16 %v2170, %v2166
    %2427 = vmatprep.subr.bf16.mxu0 %v2172
    %2428 = vmatpush1.bf16.msra.mxu0 %v2171
    %2429 = vmatprep.subr.bf16.mxu0 %v2176
    %2430 = vmatpush1.bf16.msra.mxu0 %v2175
    %2431 = vmatprep.subr.bf16.mxu0 %v2180
    %2432 = vmatpush1.bf16.msra.mxu0 %v2179
    %2433 = vmatprep.subr.bf16.mxu0 %v2184
    %2434 = vmatpush1.bf16.msra.mxu0 %v2183
    %2435 = vmatprep.subr.bf16.mxu0 %v2188
    %2436 = vmatpush1.bf16.msra.mxu0 %v2187
    %2437 = vmatprep.subr.bf16.mxu0 %v2192
    %2438 = vmatpush1.bf16.msra.mxu0 %v2191
    %2439 = vmatprep.subr.bf16.mxu0 %v2196
    %2440 = vmatpush1.bf16.msra.mxu0 %v2195
    %2441 = vmatprep.subr.bf16.mxu0 %v2200
    %2442 = vmatpush1.bf16.msra.mxu0 %v2199
    %2443 = vmatprep.subr.bf16.mxu0 %v2204
    %2444 = vmatpush1.bf16.msra.mxu0 %v2203
    %2445 = vmatprep.subr.bf16.mxu0 %v2208
    %2446 = vmatpush1.bf16.msra.mxu0 %v2207
    %2447 = vmatprep.subr.bf16.mxu0 %v2212
    %2448 = vmatpush1.bf16.msra.mxu0 %v2211
    %2449 = vmatprep.subr.bf16.mxu0 %v2216
    %2450 = vmatpush1.bf16.msra.mxu0 %v2215
    %2451 = vmatprep.subr.bf16.mxu0 %v2220
    %2452 = vmatpush1.bf16.msra.mxu0 %v2219
    %2453 = vmatprep.subr.bf16.mxu0 %v2224
    %2454 = vmatpush1.bf16.msra.mxu0 %v2223
    %2455 = vmatprep.subr.bf16.mxu0 %v2228
    %2456 = vmatpush1.bf16.msra.mxu0 %v2227
    %2457 = vmatprep.subr.bf16.mxu0 %v2232
    %2458 = vmatpush1.bf16.msra.mxu0 %v2231
    %2459 = vmatprep.mubr.bf16.mxu0 %v1762
    %2460 = vmatmul.mubr.bf16.gmra.mrb[0].mxu0 %v1761
    %v2461 = vpop.f32.mrb[0].mxu0
    %v2462 = vadd.f32 %v1770, %v2461
    %v2463 = vpop.f32.mrb[0].mxu0
    %v2464 = vadd.f32 %v1774, %v2463
    %v2465 = vpop.f32.mrb[0].mxu0
    %v2466 = vadd.f32 %v1770, %v2465
    %v2467 = vpop.f32.mrb[0].mxu0
    %v2468 = vadd.f32 %v1774, %v2467
    %2469 = vdwg.mxu0
    %2470 = vmatprep.subr.bf16.mxu0 %v2236
    %2471 = vmatpush1.bf16.msra.mxu0 %v2235
    %2472 = vmatprep.subr.bf16.mxu0 %v2240
    %2473 = vmatpush1.bf16.msra.mxu0 %v2239
    %2474 = vmatprep.subr.bf16.mxu0 %v2244
    %2475 = vmatpush1.bf16.msra.mxu0 %v2243
    %2476 = vmatprep.subr.bf16.mxu0 %v2248
    %2477 = vmatpush1.bf16.msra.mxu0 %v2247
    %2478 = vmatprep.subr.bf16.mxu0 %v2252
    %2479 = vmatpush1.bf16.msra.mxu0 %v2251
    %2480 = vmatprep.subr.bf16.mxu0 %v2256
    %2481 = vmatpush1.bf16.msra.mxu0 %v2255
    %2482 = vmatprep.subr.bf16.mxu0 %v2260
    %2483 = vmatpush1.bf16.msra.mxu0 %v2259
    %2484 = vmatprep.subr.bf16.mxu0 %v2264
    %2485 = vmatpush1.bf16.msra.mxu0 %v2263
    %2486 = vmatprep.subr.bf16.mxu0 %v2268
    %2487 = vmatpush1.bf16.msra.mxu0 %v2267
    %2488 = vmatprep.subr.bf16.mxu0 %v2272
    %2489 = vmatpush1.bf16.msra.mxu0 %v2271
    %2490 = vmatprep.subr.bf16.mxu0 %v2276
    %2491 = vmatpush1.bf16.msra.mxu0 %v2275
    %2492 = vmatprep.subr.bf16.mxu0 %v2280
    %2493 = vmatpush1.bf16.msra.mxu0 %v2279
    %2494 = vmatprep.subr.bf16.mxu0 %v2284
    %2495 = vmatpush1.bf16.msra.mxu0 %v2283
    %2496 = vmatprep.subr.bf16.mxu0 %v2288
    %2497 = vmatpush1.bf16.msra.mxu0 %v2287
    %2498 = vmatprep.subr.bf16.mxu0 %v2292
    %2499 = vmatpush1.bf16.msra.mxu0 %v2291
    %2500 = vmatprep.subr.bf16.mxu0 %v2296
    %2501 = vmatpush1.bf16.msra.mxu0 %v2295
    %2502 = vmatprep.mubr.bf16.mxu0 %v1764
    %2503 = vmatmul.mubr.bf16.gmra.mrb[0].mxu0 %v1763
    %v2504 = vpop.f32.mrb[0].mxu0
    %v2505 = vadd.f32 %v2462, %v2504
    %v2506 = vpop.f32.mrb[0].mxu0
    %v2507 = vadd.f32 %v2464, %v2506
    %v2508 = vpop.f32.mrb[0].mxu0
    %v2509 = vadd.f32 %v2466, %v2508
    %v2510 = vpop.f32.mrb[0].mxu0
    %v2511 = vadd.f32 %v2468, %v2510
    %2512 = vdwg.mxu0
    %2513 = vmatprep.subr.bf16.mxu0 %v2174
    %2514 = vmatpush1.bf16.msra.mxu0 %v2173
    %2515 = vmatprep.subr.bf16.mxu0 %v2178
    %2516 = vmatpush1.bf16.msra.mxu0 %v2177
    %2517 = vmatprep.subr.bf16.mxu0 %v2182
    %2518 = vmatpush1.bf16.msra.mxu0 %v2181
    %2519 = vmatprep.subr.bf16.mxu0 %v2186
    %2520 = vmatpush1.bf16.msra.mxu0 %v2185
    %2521 = vmatprep.subr.bf16.mxu0 %v2190
    %2522 = vmatpush1.bf16.msra.mxu0 %v2189
    %2523 = vmatprep.subr.bf16.mxu0 %v2194
    %2524 = vmatpush1.bf16.msra.mxu0 %v2193
    %2525 = vmatprep.subr.bf16.mxu0 %v2198
    %2526 = vmatpush1.bf16.msra.mxu0 %v2197
    %2527 = vmatprep.subr.bf16.mxu0 %v2202
    %2528 = vmatpush1.bf16.msra.mxu0 %v2201
    %2529 = vmatprep.subr.bf16.mxu0 %v2206
    %2530 = vmatpush1.bf16.msra.mxu0 %v2205
    %2531 = vmatprep.subr.bf16.mxu0 %v2210
    %2532 = vmatpush1.bf16.msra.mxu0 %v2209
    %2533 = vmatprep.subr.bf16.mxu0 %v2214
    %2534 = vmatpush1.bf16.msra.mxu0 %v2213
    %2535 = vmatprep.subr.bf16.mxu0 %v2218
    %2536 = vmatpush1.bf16.msra.mxu0 %v2217
    %2537 = vmatprep.subr.bf16.mxu0 %v2222
    %2538 = vmatpush1.bf16.msra.mxu0 %v2221
    %2539 = vmatprep.subr.bf16.mxu0 %v2226
    %2540 = vmatpush1.bf16.msra.mxu0 %v2225
    %2541 = vmatprep.subr.bf16.mxu0 %v2230
    %2542 = vmatpush1.bf16.msra.mxu0 %v2229
    %2543 = vmatprep.subr.bf16.mxu0 %v2234
    %2544 = vmatpush1.bf16.msra.mxu0 %v2233
    %2545 = vmatprep.mubr.bf16.mxu0 %v1762
    %2546 = vmatmul.mubr.bf16.gmra.mrb[0].mxu0 %v1761
    %v2547 = vpop.f32.mrb[0].mxu0
    %v2548 = vadd.f32 %v1778, %v2547
    %v2549 = vpop.f32.mrb[0].mxu0
    %v2550 = vadd.f32 %v1782, %v2549
    %v2551 = vpop.f32.mrb[0].mxu0
    %v2552 = vadd.f32 %v1778, %v2551
    %v2553 = vpop.f32.mrb[0].mxu0
    %v2554 = vadd.f32 %v1782, %v2553
    %2555 = vdwg.mxu0
    %2556 = vmatprep.subr.bf16.mxu0 %v2238
    %2557 = vmatpush1.bf16.msra.mxu0 %v2237
    %2558 = vmatprep.subr.bf16.mxu0 %v2242
    %2559 = vmatpush1.bf16.msra.mxu0 %v2241
    %2560 = vmatprep.subr.bf16.mxu0 %v2246
    %2561 = vmatpush1.bf16.msra.mxu0 %v2245
    %2562 = vmatprep.subr.bf16.mxu0 %v2250
    %2563 = vmatpush1.bf16.msra.mxu0 %v2249
    %2564 = vmatprep.subr.bf16.mxu0 %v2254
    %2565 = vmatpush1.bf16.msra.mxu0 %v2253
    %2566 = vmatprep.subr.bf16.mxu0 %v2258
    %2567 = vmatpush1.bf16.msra.mxu0 %v2257
    %2568 = vmatprep.subr.bf16.mxu0 %v2262
    %2569 = vmatpush1.bf16.msra.mxu0 %v2261
    %2570 = vmatprep.subr.bf16.mxu0 %v2266
    %2571 = vmatpush1.bf16.msra.mxu0 %v2265
    %2572 = vmatprep.subr.bf16.mxu0 %v2270
    %2573 = vmatpush1.bf16.msra.mxu0 %v2269
    %2574 = vmatprep.subr.bf16.mxu0 %v2274
    %2575 = vmatpush1.bf16.msra.mxu0 %v2273
    %2576 = vmatprep.subr.bf16.mxu0 %v2278
    %2577 = vmatpush1.bf16.msra.mxu0 %v2277
    %2578 = vmatprep.subr.bf16.mxu0 %v2282
    %2579 = vmatpush1.bf16.msra.mxu0 %v2281
    %2580 = vmatprep.subr.bf16.mxu0 %v2286
    %2581 = vmatpush1.bf16.msra.mxu0 %v2285
    %2582 = vmatprep.subr.bf16.mxu0 %v2290
    %2583 = vmatpush1.bf16.msra.mxu0 %v2289
    %2584 = vmatprep.subr.bf16.mxu0 %v2294
    %2585 = vmatpush1.bf16.msra.mxu0 %v2293
    %2586 = vmatprep.subr.bf16.mxu0 %v2298
    %2587 = vmatpush1.bf16.msra.mxu0 %v2297
    %2588 = vmatprep.mubr.bf16.mxu0 %v1764
    %2589 = vmatmul.mubr.bf16.gmra.mrb[0].mxu0 %v1763
    %v2590 = vpop.f32.mrb[0].mxu0
    %v2591 = vadd.f32 %v2548, %v2590
    %v2592 = vpop.f32.mrb[0].mxu0
    %v2593 = vadd.f32 %v2550, %v2592
    %v2594 = vpop.f32.mrb[0].mxu0
    %v2595 = vadd.f32 %v2552, %v2594
    %v2596 = vpop.f32.mrb[0].mxu0
    %v2597 = vadd.f32 %v2554, %v2596
    %2598 = vdwg.mxu0
    %v2599 = vmax.f32 %v2505, 0.0
    %v2600 = vmax.f32 %v2507, 0.0
    %v2601 = vmax.f32 %v2591, 0.0
    %v2602 = vmax.f32 %v2593, 0.0
    %v2603 = vmax.f32 %v2509, 0.0
    %v2604 = vmax.f32 %v2511, 0.0
    %v2605 = vmax.f32 %v2595, 0.0
    %v2606 = vmax.f32 %v2597, 0.0
    %v2607 = vld [vmem:[#allocation11] sm:$0xf]
    %v2608 = vld [vmem:[#allocation11 + $0x4] sm:$0xf]
    %v2609 = vld [vmem:[#allocation11 + $0x8] sm:$0xf]
    %v2610 = vld [vmem:[#allocation11 + $0xc] sm:$0xf]
    %v2611 = vld [vmem:[#allocation11 + $0x10] sm:$0xf]
    %v2612 = vld [vmem:[#allocation11 + $0x14] sm:$0xf]
    %v2613 = vld [vmem:[#allocation11 + $0x18] sm:$0xf]
    %v2614 = vld [vmem:[#allocation11 + $0x1c] sm:$0xf]
    %v2615 = vld [vmem:[#allocation11 + $0x20] sm:$0xf]
    %v2616 = vld [vmem:[#allocation11 + $0x24] sm:$0xf]
    %v2617 = vld [vmem:[#allocation11 + $0x28] sm:$0xf]
    %v2618 = vld [vmem:[#allocation11 + $0x2c] sm:$0xf]
    %v2619 = vld [vmem:[#allocation11 + $0x30] sm:$0xf]
    %v2620 = vld [vmem:[#allocation11 + $0x34] sm:$0xf]
    %v2621 = vld [vmem:[#allocation11 + $0x38] sm:$0xf]
    %v2622 = vld [vmem:[#allocation11 + $0x3c] sm:$0xf]
    %v2623 = vld [vmem:[#allocation11 + $0x40] sm:$0xf]
    %v2624 = vld [vmem:[#allocation11 + $0x44] sm:$0xf]
    %v2625 = vld [vmem:[#allocation11 + $0x48] sm:$0xf]
    %v2626 = vld [vmem:[#allocation11 + $0x4c] sm:$0xf]
    %v2627 = vld [vmem:[#allocation11 + $0x50] sm:$0xf]
    %v2628 = vld [vmem:[#allocation11 + $0x54] sm:$0xf]
    %v2629 = vld [vmem:[#allocation11 + $0x58] sm:$0xf]
    %v2630 = vld [vmem:[#allocation11 + $0x5c] sm:$0xf]
    %v2631 = vld [vmem:[#allocation11 + $0x60] sm:$0xf]
    %v2632 = vld [vmem:[#allocation11 + $0x64] sm:$0xf]
    %v2633 = vld [vmem:[#allocation11 + $0x68] sm:$0xf]
    %v2634 = vld [vmem:[#allocation11 + $0x6c] sm:$0xf]
    %v2635 = vld [vmem:[#allocation11 + $0x70] sm:$0xf]
    %v2636 = vld [vmem:[#allocation11 + $0x74] sm:$0xf]
    %v2637 = vld [vmem:[#allocation11 + $0x78] sm:$0xf]
    %v2638 = vld [vmem:[#allocation11 + $0x7c] sm:$0xf]
    %v2639 = vld [vmem:[#allocation11 + $0x80] sm:$0xf]
    %v2640 = vld [vmem:[#allocation11 + $0x84] sm:$0xf]
    %v2641 = vld [vmem:[#allocation11 + $0x88] sm:$0xf]
    %v2642 = vld [vmem:[#allocation11 + $0x8c] sm:$0xf]
    %v2643 = vld [vmem:[#allocation11 + $0x90] sm:$0xf]
    %v2644 = vld [vmem:[#allocation11 + $0x94] sm:$0xf]
    %v2645 = vld [vmem:[#allocation11 + $0x98] sm:$0xf]
    %v2646 = vld [vmem:[#allocation11 + $0x9c] sm:$0xf]
    %v2647 = vld [vmem:[#allocation11 + $0xa0] sm:$0xf]
    %v2648 = vld [vmem:[#allocation11 + $0xa4] sm:$0xf]
    %v2649 = vld [vmem:[#allocation11 + $0xa8] sm:$0xf]
    %v2650 = vld [vmem:[#allocation11 + $0xac] sm:$0xf]
    %v2651 = vld [vmem:[#allocation11 + $0xb0] sm:$0xf]
    %v2652 = vld [vmem:[#allocation11 + $0xb4] sm:$0xf]
    %v2653 = vld [vmem:[#allocation11 + $0xb8] sm:$0xf]
    %v2654 = vld [vmem:[#allocation11 + $0xbc] sm:$0xf]
    %v2655 = vld [vmem:[#allocation11 + $0xc0] sm:$0xf]
    %v2656 = vld [vmem:[#allocation11 + $0xc4] sm:$0xf]
    %v2657 = vld [vmem:[#allocation11 + $0xc8] sm:$0xf]
    %v2658 = vld [vmem:[#allocation11 + $0xcc] sm:$0xf]
    %v2659 = vld [vmem:[#allocation11 + $0xd0] sm:$0xf]
    %v2660 = vld [vmem:[#allocation11 + $0xd4] sm:$0xf]
    %v2661 = vld [vmem:[#allocation11 + $0xd8] sm:$0xf]
    %v2662 = vld [vmem:[#allocation11 + $0xdc] sm:$0xf]
    %v2663 = vld [vmem:[#allocation11 + $0xe0] sm:$0xf]
    %v2664 = vld [vmem:[#allocation11 + $0xe4] sm:$0xf]
    %v2665 = vld [vmem:[#allocation11 + $0xe8] sm:$0xf]
    %v2666 = vld [vmem:[#allocation11 + $0xec] sm:$0xf]
    %v2667 = vld [vmem:[#allocation11 + $0xf0] sm:$0xf]
    %v2668 = vld [vmem:[#allocation11 + $0xf4] sm:$0xf]
    %v2669 = vld [vmem:[#allocation11 + $0xf8] sm:$0xf]
    %v2670 = vld [vmem:[#allocation11 + $0xfc] sm:$0xf]
    %v2671 = vpack.c.bf16 %v2603, %v2599
    %v2672 = vpack.c.bf16 %v2604, %v2600
    %v2673 = vpack.c.bf16 %v2605, %v2601
    %v2674 = vpack.c.bf16 %v2606, %v2602
    %v2739 = vunpack.c.l.b16 %v2607
    %v2740 = vunpack.c.l.b16 %v2608
    %v2741 = vunpack.c.l.b16 %v2609
    %v2742 = vunpack.c.l.b16 %v2610
    %v2743 = vunpack.c.l.b16 %v2611
    %v2744 = vunpack.c.l.b16 %v2612
    %v2745 = vunpack.c.l.b16 %v2613
    %v2746 = vunpack.c.l.b16 %v2614
    %v2747 = vunpack.c.l.b16 %v2615
    %v2748 = vunpack.c.l.b16 %v2616
    %v2749 = vunpack.c.l.b16 %v2617
    %v2750 = vunpack.c.l.b16 %v2618
    %v2751 = vunpack.c.l.b16 %v2619
    %v2752 = vunpack.c.l.b16 %v2620
    %v2753 = vunpack.c.l.b16 %v2621
    %v2754 = vunpack.c.l.b16 %v2622
    %v2755 = vunpack.c.l.b16 %v2623
    %v2756 = vunpack.c.l.b16 %v2624
    %v2757 = vunpack.c.l.b16 %v2625
    %v2758 = vunpack.c.l.b16 %v2626
    %v2759 = vunpack.c.l.b16 %v2627
    %v2760 = vunpack.c.l.b16 %v2628
    %v2761 = vunpack.c.l.b16 %v2629
    %v2762 = vunpack.c.l.b16 %v2630
    %v2763 = vunpack.c.l.b16 %v2631
    %v2764 = vunpack.c.l.b16 %v2632
    %v2765 = vunpack.c.l.b16 %v2633
    %v2766 = vunpack.c.l.b16 %v2634
    %v2767 = vunpack.c.l.b16 %v2635
    %v2768 = vunpack.c.l.b16 %v2636
    %v2769 = vunpack.c.l.b16 %v2637
    %v2770 = vunpack.c.l.b16 %v2638
    %v2771 = vunpack.c.l.b16 %v2639
    %v2772 = vunpack.c.l.b16 %v2640
    %v2773 = vunpack.c.l.b16 %v2641
    %v2774 = vunpack.c.l.b16 %v2642
    %v2775 = vunpack.c.l.b16 %v2643
    %v2776 = vunpack.c.l.b16 %v2644
    %v2777 = vunpack.c.l.b16 %v2645
    %v2778 = vunpack.c.l.b16 %v2646
    %v2779 = vunpack.c.l.b16 %v2647
    %v2780 = vunpack.c.l.b16 %v2648
    %v2781 = vunpack.c.l.b16 %v2649
    %v2782 = vunpack.c.l.b16 %v2650
    %v2783 = vunpack.c.l.b16 %v2651
    %v2784 = vunpack.c.l.b16 %v2652
    %v2785 = vunpack.c.l.b16 %v2653
    %v2786 = vunpack.c.l.b16 %v2654
    %v2787 = vunpack.c.l.b16 %v2655
    %v2788 = vunpack.c.l.b16 %v2656
    %v2789 = vunpack.c.l.b16 %v2657
    %v2790 = vunpack.c.l.b16 %v2658
    %v2791 = vunpack.c.l.b16 %v2659
    %v2792 = vunpack.c.l.b16 %v2660
    %v2793 = vunpack.c.l.b16 %v2661
    %v2794 = vunpack.c.l.b16 %v2662
    %v2795 = vunpack.c.l.b16 %v2663
    %v2796 = vunpack.c.l.b16 %v2664
    %v2797 = vunpack.c.l.b16 %v2665
    %v2798 = vunpack.c.l.b16 %v2666
    %v2799 = vunpack.c.l.b16 %v2667
    %v2800 = vunpack.c.l.b16 %v2668
    %v2801 = vunpack.c.l.b16 %v2669
    %v2802 = vunpack.c.l.b16 %v2670
    %v2803 = vpack.c.b16 %v2740, %v2739
    %v2804 = vpack.c.b16 %v2742, %v2741
    %v2805 = vpack.c.b16 %v2744, %v2743
    %v2806 = vpack.c.b16 %v2746, %v2745
    %v2807 = vpack.c.b16 %v2748, %v2747
    %v2808 = vpack.c.b16 %v2750, %v2749
    %v2809 = vpack.c.b16 %v2752, %v2751
    %v2810 = vpack.c.b16 %v2754, %v2753
    %v2811 = vpack.c.b16 %v2756, %v2755
    %v2812 = vpack.c.b16 %v2758, %v2757
    %v2813 = vpack.c.b16 %v2760, %v2759
    %v2814 = vpack.c.b16 %v2762, %v2761
    %v2815 = vpack.c.b16 %v2764, %v2763
    %v2816 = vpack.c.b16 %v2766, %v2765
    %v2817 = vpack.c.b16 %v2768, %v2767
    %v2818 = vpack.c.b16 %v2770, %v2769
    %v2819 = vpack.c.b16 %v2772, %v2771
    %v2820 = vpack.c.b16 %v2774, %v2773
    %v2821 = vpack.c.b16 %v2776, %v2775
    %v2822 = vpack.c.b16 %v2778, %v2777
    %v2823 = vpack.c.b16 %v2780, %v2779
    %v2824 = vpack.c.b16 %v2782, %v2781
    %v2825 = vpack.c.b16 %v2784, %v2783
    %v2826 = vpack.c.b16 %v2786, %v2785
    %v2827 = vpack.c.b16 %v2788, %v2787
    %v2828 = vpack.c.b16 %v2790, %v2789
    %v2829 = vpack.c.b16 %v2792, %v2791
    %v2830 = vpack.c.b16 %v2794, %v2793
    %v2831 = vpack.c.b16 %v2796, %v2795
    %v2832 = vpack.c.b16 %v2798, %v2797
    %v2833 = vpack.c.b16 %v2800, %v2799
    %v2834 = vpack.c.b16 %v2802, %v2801
    %2867 = vmatprep.subr.bf16.mxu0 0
    %2868 = vmatpush1.bf16.msra.mxu0 %v2803
    %2869 = vmatprep.subr.bf16.mxu0 0
    %2870 = vmatpush1.bf16.msra.mxu0 %v2804
    %2871 = vmatprep.subr.bf16.mxu0 0
    %2872 = vmatpush1.bf16.msra.mxu0 %v2805
    %2873 = vmatprep.subr.bf16.mxu0 0
    %2874 = vmatpush1.bf16.msra.mxu0 %v2806
    %2875 = vmatprep.subr.bf16.mxu0 0
    %2876 = vmatpush1.bf16.msra.mxu0 %v2807
    %2877 = vmatprep.subr.bf16.mxu0 0
    %2878 = vmatpush1.bf16.msra.mxu0 %v2808
    %2879 = vmatprep.subr.bf16.mxu0 0
    %2880 = vmatpush1.bf16.msra.mxu0 %v2809
    %2881 = vmatprep.subr.bf16.mxu0 0
    %2882 = vmatpush1.bf16.msra.mxu0 %v2810
    %2883 = vmatprep.subr.bf16.mxu0 0
    %2884 = vmatpush1.bf16.msra.mxu0 %v2811
    %2885 = vmatprep.subr.bf16.mxu0 0
    %2886 = vmatpush1.bf16.msra.mxu0 %v2812
    %2887 = vmatprep.subr.bf16.mxu0 0
    %2888 = vmatpush1.bf16.msra.mxu0 %v2813
    %2889 = vmatprep.subr.bf16.mxu0 0
    %2890 = vmatpush1.bf16.msra.mxu0 %v2814
    %2891 = vmatprep.subr.bf16.mxu0 0
    %2892 = vmatpush1.bf16.msra.mxu0 %v2815
    %2893 = vmatprep.subr.bf16.mxu0 0
    %2894 = vmatpush1.bf16.msra.mxu0 %v2816
    %2895 = vmatprep.subr.bf16.mxu0 0
    %2896 = vmatpush1.bf16.msra.mxu0 %v2817
    %2897 = vmatprep.subr.bf16.mxu0 0
    %2898 = vmatpush1.bf16.msra.mxu0 %v2818
    %2899 = vmatprep.mubr.bf16.mxu0 %v2672
    %2900 = vmatmul.mubr.bf16.gmra.mrb[0].mxu0 %v2671
    %v2901 = vpop.f32.mrb[0].mxu0
    %v2902 = vadd.f32 0.0, %v2901
    %v2903 = vpop.f32.mrb[0].mxu0
    %v2904 = vpop.f32.mrb[0].mxu0
    %v2905 = vadd.f32 0.0, %v2904
    %v2906 = vpop.f32.mrb[0].mxu0
    %2907 = vdwg.mxu0
    %2908 = vmatprep.subr.bf16.mxu0 0
    %2909 = vmatpush1.bf16.msra.mxu0 %v2819
    %2910 = vmatprep.subr.bf16.mxu0 0
    %2911 = vmatpush1.bf16.msra.mxu0 %v2820
    %2912 = vmatprep.subr.bf16.mxu0 0
    %2913 = vmatpush1.bf16.msra.mxu0 %v2821
    %2914 = vmatprep.subr.bf16.mxu0 0
    %2915 = vmatpush1.bf16.msra.mxu0 %v2822
    %2916 = vmatprep.subr.bf16.mxu0 0
    %2917 = vmatpush1.bf16.msra.mxu0 %v2823
    %2918 = vmatprep.subr.bf16.mxu0 0
    %2919 = vmatpush1.bf16.msra.mxu0 %v2824
    %2920 = vmatprep.subr.bf16.mxu0 0
    %2921 = vmatpush1.bf16.msra.mxu0 %v2825
    %2922 = vmatprep.subr.bf16.mxu0 0
    %2923 = vmatpush1.bf16.msra.mxu0 %v2826
    %2924 = vmatprep.subr.bf16.mxu0 0
    %2925 = vmatpush1.bf16.msra.mxu0 %v2827
    %2926 = vmatprep.subr.bf16.mxu0 0
    %2927 = vmatpush1.bf16.msra.mxu0 %v2828
    %2928 = vmatprep.subr.bf16.mxu0 0
    %2929 = vmatpush1.bf16.msra.mxu0 %v2829
    %2930 = vmatprep.subr.bf16.mxu0 0
    %2931 = vmatpush1.bf16.msra.mxu0 %v2830
    %2932 = vmatprep.subr.bf16.mxu0 0
    %2933 = vmatpush1.bf16.msra.mxu0 %v2831
    %2934 = vmatprep.subr.bf16.mxu0 0
    %2935 = vmatpush1.bf16.msra.mxu0 %v2832
    %2936 = vmatprep.subr.bf16.mxu0 0
    %2937 = vmatpush1.bf16.msra.mxu0 %v2833
    %2938 = vmatprep.subr.bf16.mxu0 0
    %2939 = vmatpush1.bf16.msra.mxu0 %v2834
    %2940 = vmatprep.mubr.bf16.mxu0 %v2674
    %2941 = vmatmul.mubr.bf16.gmra.mrb[0].mxu0 %v2673
    %v2942 = vpop.f32.mrb[0].mxu0
    %v2943 = vadd.f32 %v2902, %v2942
    %v2944 = vpop.f32.mrb[0].mxu0
    %v2945 = vpop.f32.mrb[0].mxu0
    %v2946 = vadd.f32 %v2905, %v2945
    %v2947 = vpop.f32.mrb[0].mxu0
    %2948 = vdwg.mxu0
    %v2949 = vpack.c.bf16 %v2946, %v2943
    %v2950 = vld [vmem:[%s9] sm:$0x1]
    %v2952 = vlaneseq
    %v2953 = vshrl.u32 %v2952, 7
    %v2954 = vsub.s32 0, %v2953
    %v2955 = vrot.slane %v2950, %v2954
    %2957 = vmatprep.subr.bf16.mxu0 0
    %2958 = vmatpush1.bf16.msra.mxu0 %v2949
    %2959 = vmatprep.subr.bf16.mxu0 0
    %2960 = vmatpush1.bf16.msra.mxu0 0
    %2961 = vmatprep.subr.bf16.mxu0 0
    %2962 = vmatpush1.bf16.msra.mxu0 0
    %2963 = vmatprep.subr.bf16.mxu0 0
    %2964 = vmatpush1.bf16.msra.mxu0 0
    %2965 = vmatprep.subr.bf16.mxu0 0
    %2966 = vmatpush1.bf16.msra.mxu0 0
    %2967 = vmatprep.subr.bf16.mxu0 0
    %2968 = vmatpush1.bf16.msra.mxu0 0
    %2969 = vmatprep.subr.bf16.mxu0 0
    %2970 = vmatpush1.bf16.msra.mxu0 0
    %2971 = vmatprep.subr.bf16.mxu0 0
    %2972 = vmatpush1.bf16.msra.mxu0 0
    %2973 = vmatprep.subr.bf16.mxu0 0
    %2974 = vmatpush1.bf16.msra.mxu0 0
    %2975 = vmatprep.subr.bf16.mxu0 0
    %2976 = vmatpush1.bf16.msra.mxu0 0
    %2977 = vmatprep.subr.bf16.mxu0 0
    %2978 = vmatpush1.bf16.msra.mxu0 0
    %2979 = vmatprep.subr.bf16.mxu0 0
    %2980 = vmatpush1.bf16.msra.mxu0 0
    %2981 = vmatprep.subr.bf16.mxu0 0
    %2982 = vmatpush1.bf16.msra.mxu0 0
    %2983 = vmatprep.subr.bf16.mxu0 0
    %2984 = vmatpush1.bf16.msra.mxu0 0
    %2985 = vmatprep.subr.bf16.mxu0 0
    %2986 = vmatpush1.bf16.msra.mxu0 0
    %2987 = vmatprep.subr.bf16.mxu0 0
    %2988 = vmatpush1.bf16.msra.mxu0 0
    %2989 = vmatprep.mubr.bf16.mxu0 0
    %2990 = vmatmul.mubr.bf16.gmra.mrb[0].mxu0 %v159
    %v2991 = vpop.f32.mrb[0].mxu0
    %v2992 = vadd.f32 %v2955, %v2991
    %v2993 = vpop.f32.mrb[0].mxu0
    %v2994 = vpop.f32.mrb[0].mxu0
    %v2995 = vadd.f32 %v2955, %v2994
    %v2996 = vpop.f32.mrb[0].mxu0
    %2997 = vdwg.mxu0
    %2998 = vst [vmem:[#allocation13] sm:$0xff] %v2992
    %2999 = vst [vmem:[#allocation13 + $0x8] sm:$0xff] %v2995
    // Predicated region
    $region66: #{tpu_custom_call.1} parent=1 // pred_check
      _
    $region67: #{tpu_custom_call.1} parent=1 // pred_check_branch
      %3001 = sbr.rel (0) target = $region69
    $region68: #{tpu_custom_call.1} parent=1 // pred_region
      %s3003 = ssub.s32 256, 256
      %3004 = vsyncadd [#allocation4], %s3003
      %s3005 = sshll.u32 [#allocation13], 4
      %s3006 = int_to_ptr.vmem [resolvable:$true] %s3005
      %3011 = dma.vmem_to_hbm [thread:$0]  %s3006, 256, %s10, [#allocation4], 128, 128, 8
    $region69: #{tpu_custom_call.1} parent=1 // pred_fallthru
      _
    // Predicated region
    $region70: #{tpu_custom_call.1} parent=1 // pred_check
      _
    $region71: #{tpu_custom_call.1} parent=1 // pred_check_branch
      %3013 = sbr.rel (0) target = $region73
    $region72: #{tpu_custom_call.1} parent=1 // pred_region
      %3014 = dma.done [#allocation4], 256
    $region73: #{tpu_custom_call.1} parent=1 // pred_fallthru
      _
    %3015 = vsyncpa [#allocation3], 1
    %3016 = vsyncpa [#allocation6], 1
    %3017 = vsyncpa [#allocation9], 1
    %3018 = vsyncpa [#allocation12], 1
    %3019 = vsyncpa [#allocation4], 1

</llo_original>
